<compile_context>
chip_gen: v7x
topology: tpu7x:2x2x1
jax: 0.10.0
libtpu: 0.0.40
codegen_flags: <defaults>
</compile_context>

<pallas_src>
import functools

import jax
import jax.numpy as jnp
from jax import lax
from jax.experimental import pallas as pl
from jax.experimental.pallas import tpu as pltpu


def _make_selectors(H, W, h_out, w_out):
    """Constant selector / pad tensors (host-side, fetched once by the kernel).

    selc[s, kx*w_out + j] = 0.5 if x-column s contributes to avg-pooled column (2j+kx-1)
    selr[ky*h_out + i, t] = 0.5 if x-row    t contributes to avg-pooled row    (2i+ky-1)
    (all-zero rows/cols implement the conv/max-pool zero padding)
    padb[r, q] = 0 where the tap is a real value, -FLT_MAX where it is padding.
    """
    Ha, Wa = H - 1, W - 1

    q = jnp.arange(3 * w_out)
    v = 2 * (q % w_out) + q // w_out - 1          # avg-pooled column index of tap q
    ok_c = (v >= 0) & (v < Wa)
    s = jnp.arange(W)[:, None]
    selc = jnp.where(ok_c[None, :] & ((s == v[None, :]) | (s == v[None, :] + 1)),
                     0.5, 0.0).astype(jnp.float32)                     # (W, 3*w_out)

    r = jnp.arange(3 * h_out)
    u = 2 * (r % h_out) + r // h_out - 1          # avg-pooled row index of tap r
    ok_r = (u >= 0) & (u < Ha)
    t = jnp.arange(H)[None, :]
    selr = jnp.where(ok_r[:, None] & ((t == u[:, None]) | (t == u[:, None] + 1)),
                     0.5, 0.0).astype(jnp.float32)                     # (3*h_out, H)

    padb = jnp.where(ok_r[:, None] & ok_c[None, :], 0.0,
                     jnp.finfo(jnp.float32).min).astype(jnp.float32)   # (3h, 3w)
    return selc, selr, padb


def _adown_kernel(x_ref, selc_ref, selr_ref, padb_ref,
                  w1_ref, b1_ref, w2_ref, b2_ref, o_ref, *,
                  c_half, c_out, h_out, w_out):
    """One grid step: Bt batch images of ADown.

    x_ref   : (Bt, c1, H, W)          VMEM  input (NCHW)
    selc_ref: (W, 3*w_out)            VMEM  fused avg-pool + width tap selector
    selr_ref: (3*h_out, H)            VMEM  fused avg-pool + height tap selector
    padb_ref: (3*h_out, 3*w_out)      VMEM  max-pool pad bias (0 / -FLT_MAX)
    w1_ref  : (c_out, 9*c_half)       VMEM  cv1 weights (BN folded), im2col order
    b1_ref  : (1, c_out, 1)           VMEM  cv1 folded-BN bias
    w2_ref  : (c_out, c_half)         VMEM  cv2 weights (BN folded)
    b2_ref  : (1, c_out, 1)           VMEM  cv2 folded-BN bias
    o_ref   : (Bt, 2*c_out, h_out*w_out) VMEM output, lane-dense flat spatial
    """
    Bt, c1, H, W = x_ref.shape
    hw = h_out * w_out

    # Cast before any accumulation so a future bf16 activation path stays exact.
    x = x_ref[...].astype(jnp.float32)                                   # (Bt, c1, H, W)

    # ---- fused {avg_pool2d(2,1,0) + zero-pad(1) + stride-2 3x3 tap gather} on the MXU ----
    cols = jnp.dot(x.reshape(Bt * c1 * H, W), selc_ref[...],
                   preferred_element_type=jnp.float32)                   # (Bt*c1*H, 3w)
    cols = cols.reshape(Bt * c1, H, 3 * w_out)
    selr = jnp.broadcast_to(selr_ref[...][None], (Bt * c1, 3 * h_out, H))
    taps = lax.dot_general(selr, cols,
                           dimension_numbers=(((2,), (1,)), ((0,), (0,))),
                           preferred_element_type=jnp.float32)           # (Bt*c1, 3h, 3w)
    taps = taps.reshape(Bt, c1, 3 * h_out, 3 * w_out)
    # taps[b, c, ky*h_out+i, kx*w_out+j] == zero_pad(avg_pool2d(x,2,1,0))[b, c, 2i+ky-1, 2j+kx-1]

    # ---- branch 1: Conv 3x3 / s2 / p1 (BN folded) + SiLU, as ONE im2col batched matmul ----
    t1 = taps[:, :c_half]                                                # (Bt, c_half, 3h, 3w)
    im2col = jnp.concatenate(
        [t1[:, :, ky * h_out:(ky + 1) * h_out, kx * w_out:(kx + 1) * w_out]
         for ky in range(3) for kx in range(3)], axis=1)                 # (Bt, 9*c_half, h, w)
    im2col = im2col.reshape(Bt, 9 * c_half, hw)
    w1 = jnp.broadcast_to(w1_ref[...][None], (Bt, c_out, 9 * c_half))
    y1 = lax.dot_general(w1, im2col,
                         dimension_numbers=(((2,), (1,)), ((0,), (0,))),
                         preferred_element_type=jnp.float32)             # (Bt, c_out, hw)
    y1 = y1 + b1_ref[...]
    y1 = y1 * jax.nn.sigmoid(y1)                                         # SiLU (EUP slot)

    # ---- branch 2: max_pool 3x3 / s2 / p1, then Conv 1x1 (BN folded) + SiLU ----
    t2 = taps[:, c_half:] + padb_ref[...]                                # pad taps -> -FLT_MAX
    m = None
    for ky in range(3):
        for kx in range(3):
            blk = t2[:, :, ky * h_out:(ky + 1) * h_out, kx * w_out:(kx + 1) * w_out]
            m = blk if m is None else jnp.maximum(m, blk)                # (Bt, c_half, h, w)
    m = m.reshape(Bt, c_half, hw)
    w2 = jnp.broadcast_to(w2_ref[...][None], (Bt, c_out, c_half))
    y2 = lax.dot_general(w2, m,
                         dimension_numbers=(((2,), (1,)), ((0,), (0,))),
                         preferred_element_type=jnp.float32)             # (Bt, c_out, hw)
    y2 = y2 + b2_ref[...]
    y2 = y2 * jax.nn.sigmoid(y2)

    # ---- channel concat: two lane-dense block stores (branch 1 channels, then branch 2) ----
    o_ref[:, 0:c_out, :] = y1.astype(o_ref.dtype)
    o_ref[:, c_out:2 * c_out, :] = y2.astype(o_ref.dtype)


def adown_forward(x, w1, b1, w2, b2, *, max_bt=8):
    """ADown forward.  x: (B, c1, H, W) NCHW (PyTorch layout).

    w1: (3, 3, c1//2, c2//2) HWIO, BN folded.   b1: (c2//2,)
    w2: (1, 1, c1//2, c2//2) HWIO, BN folded.   b2: (c2//2,)
    returns (B, c2, Ho, Wo) NCHW.
    """
    B, c1, H, W = x.shape
    c_half = c1 // 2
    c_out = w1.shape[-1]
    c2 = 2 * c_out
    Ha, Wa = H - 1, W - 1
    h_out = (Ha - 1) // 2 + 1
    w_out = (Wa - 1) // 2 + 1
    hw = h_out * w_out

    # Largest divisor of B that is <= max_bt: amortizes the per-grid-step overhead.
    # (With realistic B, B // bt >= 2 also keeps both v7x TensorCores busy.)
    bt = 1
    for cand in range(1, min(B, max_bt) + 1):
        if B % cand == 0:
            bt = cand

    selc, selr, padb = _make_selectors(H, W, h_out, w_out)
    # cv1 weights reordered to the im2col ordering k = (ky*3+kx)*c_half + ci.
    w1m = jnp.transpose(w1.astype(jnp.float32).reshape(9 * c_half, c_out))  # (c_out, 9*c_half)
    w2m = jnp.transpose(w2.astype(jnp.float32).reshape(c_half, c_out))      # (c_out, c_half)
    b1m = b1.astype(jnp.float32).reshape(1, c_out, 1)
    b2m = b2.astype(jnp.float32).reshape(1, c_out, 1)

    kernel = functools.partial(_adown_kernel, c_half=c_half, c_out=c_out,
                               h_out=h_out, w_out=w_out)

    out_flat = pl.pallas_call(
        kernel,
        out_shape=jax.ShapeDtypeStruct((B, c2, hw), x.dtype),
        grid_spec=pltpu.PrefetchScalarGridSpec(
            num_scalar_prefetch=0,
            grid=(B // bt,),
            in_specs=[
                pl.BlockSpec((bt, c1, H, W), lambda g: (g, 0, 0, 0)),
                # constant blocks: same block index every step -> fetched once
                pl.BlockSpec(selc.shape, lambda g: (0, 0)),
                pl.BlockSpec(selr.shape, lambda g: (0, 0)),
                pl.BlockSpec(padb.shape, lambda g: (0, 0)),
                pl.BlockSpec(w1m.shape, lambda g: (0, 0)),
                pl.BlockSpec(b1m.shape, lambda g: (0, 0, 0)),
                pl.BlockSpec(w2m.shape, lambda g: (0, 0)),
                pl.BlockSpec(b2m.shape, lambda g: (0, 0, 0)),
            ],
            out_specs=pl.BlockSpec((bt, c2, hw), lambda g: (g, 0, 0)),
        ),
        compiler_params=pltpu.CompilerParams(
            dimension_semantics=("parallel",),
            vmem_limit_bytes=32 * 1024 * 1024),
    )(x, selc, selr, padb, w1m, b1m, w2m, b2m)

    # Layout plumbing only: kernel writes a lane-dense (B, c2, Ho*Wo) slab.
    return out_flat.reshape(B, c2, h_out, w_out)


def make_conv_bn_params(key, cin, cout, k, eps=1e-5):
    """Deterministic Conv2d(bias=False) + eval-mode BatchNorm2d, BN folded."""
    kw, kg, kb, km, kv = jax.random.split(key, 5)
    w = jax.random.normal(kw, (k, k, cin, cout), jnp.float32) * 0.1
    gamma = 1.0 + 0.1 * jax.random.normal(kg, (cout,), jnp.float32)
    beta = 0.1 * jax.random.normal(kb, (cout,), jnp.float32)
    running_mean = 0.1 * jax.random.normal(km, (cout,), jnp.float32)
    running_var = jax.random.uniform(kv, (cout,), jnp.float32, 0.5, 1.5)
    scale = gamma / jnp.sqrt(running_var + eps)
    return w * scale, beta - running_mean * scale


def _adown_reference(x, w1, b1, w2, b2):
    """Pure-JAX reference (same semantics as the PyTorch module in eval mode)."""
    c_half = x.shape[1] // 2
    p = 0.25 * (x[:, :, :-1, :-1] + x[:, :, 1:, :-1]
                + x[:, :, :-1, 1:] + x[:, :, 1:, 1:])
    p1, p2 = p[:, :c_half], p[:, c_half:]
    y1 = lax.conv_general_dilated(
        p1, w1, window_strides=(2, 2), padding=((1, 1), (1, 1)),
        dimension_numbers=('NCHW', 'HWIO', 'NCHW'),
        precision=lax.Precision.HIGHEST)
    y1 = y1 + b1.reshape(1, -1, 1, 1)
    y1 = y1 * jax.nn.sigmoid(y1)
    m2 = lax.reduce_window(
        p2, -jnp.inf, lax.max,
        window_dimensions=(1, 1, 3, 3), window_strides=(1, 1, 2, 2),
        padding=((0, 0), (0, 0), (1, 1), (1, 1)))
    y2 = jnp.einsum('bchw,cd->bdhw', m2, w2[0, 0],
                    precision=lax.Precision.HIGHEST) + b2.reshape(1, -1, 1, 1)
    y2 = y2 * jax.nn.sigmoid(y2)
    return jnp.concatenate([y1, y2], axis=1)


if __name__ == "__main__":
    # Module config: ADown(c1=4, c2=4) -> cv1: Conv(2,2,3,2,1), cv2: Conv(2,2,1,1,0)
    B, c1, c2, H, W = 2, 4, 4, 16, 16
    c_half, c_out = c1 // 2, c2 // 2

    key = jax.random.PRNGKey(0)
    kx, k1, k2 = jax.random.split(key, 3)
    x = jax.random.normal(kx, (B, c1, H, W), jnp.float32)   # PyTorch NCHW input

    w1, b1 = make_conv_bn_params(k1, c_half, c_out, k=3)    # cv1 (BN folded)
    w2, b2 = make_conv_bn_params(k2, c_half, c_out, k=1)    # cv2 (BN folded)

    out = adown_forward(x, w1, b1, w2, b2)
    out = jax.block_until_ready(out)

    ref = _adown_reference(x, w1, b1, w2, b2)
    assert out.shape == ref.shape == (B, c2, H // 2, W // 2), out.shape
    err = float(jnp.max(jnp.abs(out - ref)))
    assert jnp.allclose(out, ref, atol=2e-4, rtol=1e-3), f"max abs err = {err}"
    print("KERNEL_OK")
</pallas_src>

<mosaic_0001>
module attributes {stable_mosaic.version = 11 : i64} {
  func.func @_adown_kernel(%arg0: i32, %arg1: memref<2x4x16x16xf32, #tpu.memory_space<vmem>>, %arg2: memref<16x24xf32, #tpu.memory_space<vmem>>, %arg3: memref<24x16xf32, #tpu.memory_space<vmem>>, %arg4: memref<24x24xf32, #tpu.memory_space<vmem>>, %arg5: memref<2x18xf32, #tpu.memory_space<vmem>>, %arg6: memref<1x2x1xf32, #tpu.memory_space<vmem>>, %arg7: memref<2x2xf32, #tpu.memory_space<vmem>>, %arg8: memref<1x2x1xf32, #tpu.memory_space<vmem>>, %arg9: memref<2x4x64xf32, #tpu.memory_space<vmem>>) attributes {dimension_semantics = [#tpu.dimension_semantics<parallel>], iteration_bounds = array<i64: 1>, scalar_prefetch = 0 : i64, scratch_operands = 0 : i64, tpu.core_type = #tpu.core_type<tc>, window_params = [{transform_indices = @transform_0, window_bounds = array<i64: 2, 4, 16, 16>}, {pipeline_mode = #tpu.pipeline_mode<synchronous>, transform_indices = @transform_1, window_bounds = array<i64: 16, 24>}, {pipeline_mode = #tpu.pipeline_mode<synchronous>, transform_indices = @transform_2, window_bounds = array<i64: 24, 16>}, {pipeline_mode = #tpu.pipeline_mode<synchronous>, transform_indices = @transform_3, window_bounds = array<i64: 24, 24>}, {pipeline_mode = #tpu.pipeline_mode<synchronous>, transform_indices = @transform_4, window_bounds = array<i64: 2, 18>}, {pipeline_mode = #tpu.pipeline_mode<synchronous>, transform_indices = @transform_5, window_bounds = array<i64: 1, 2, 1>}, {pipeline_mode = #tpu.pipeline_mode<synchronous>, transform_indices = @transform_6, window_bounds = array<i64: 2, 2>}, {pipeline_mode = #tpu.pipeline_mode<synchronous>, transform_indices = @transform_7, window_bounds = array<i64: 1, 2, 1>}, {transform_indices = @transform_8, window_bounds = array<i64: 2, 4, 64>}]} {
    %c0 = arith.constant 0 : index
    %c0_0 = arith.constant 0 : index
    %c0_1 = arith.constant 0 : index
    %c0_2 = arith.constant 0 : index
    %0 = vector.load %arg1[%c0, %c0_0, %c0_1, %c0_2] : memref<2x4x16x16xf32, #tpu.memory_space<vmem>>, vector<2x4x16x16xf32>
    %1 = vector.shape_cast %0 : vector<2x4x16x16xf32> to vector<128x16xf32>
    %c0_3 = arith.constant 0 : index
    %c0_4 = arith.constant 0 : index
    %2 = vector.load %arg2[%c0_3, %c0_4] : memref<16x24xf32, #tpu.memory_space<vmem>>, vector<16x24xf32>
    %cst = arith.constant dense<0.000000e+00> : vector<128x24xf32>
    %3 = tpu.matmul %1, %2, %cst {dimension_numbers = #tpu.dot_dimension_numbers<[1], [0], [0], [1], [0, 0, 1, 1], [], []>} : vector<128x16xf32>, vector<16x24xf32>, vector<128x24xf32> -> vector<128x24xf32>
    %4 = vector.shape_cast %3 : vector<128x24xf32> to vector<8x16x24xf32>
    %c0_5 = arith.constant 0 : index
    %c0_6 = arith.constant 0 : index
    %5 = vector.load %arg3[%c0_5, %c0_6] : memref<24x16xf32, #tpu.memory_space<vmem>>, vector<24x16xf32>
    %6 = vector.shape_cast %5 : vector<24x16xf32> to vector<1x24x16xf32>
    %7 = vector.shape_cast %6 : vector<1x24x16xf32> to vector<1x24x16xf32>
    %8 = vector.broadcast %7 : vector<1x24x16xf32> to vector<8x24x16xf32>
    %cst_7 = arith.constant dense<0.000000e+00> : vector<8x24x24xf32>
    %9 = tpu.matmul %8, %4, %cst_7 {dimension_numbers = #tpu.dot_dimension_numbers<[2], [1], [1], [2], [0, 0, 0, 1, 1, 2], [0], [0]>} : vector<8x24x16xf32>, vector<8x16x24xf32>, vector<8x24x24xf32> -> vector<8x24x24xf32>
    %10 = vector.shape_cast %9 : vector<8x24x24xf32> to vector<2x4x24x24xf32>
    %11 = vector.extract_strided_slice %10 {offsets = [0, 0, 0, 0], sizes = [2, 2, 24, 24], strides = [1, 1, 1, 1]} : vector<2x4x24x24xf32> to vector<2x2x24x24xf32>
    %12 = vector.extract_strided_slice %11 {offsets = [0, 0, 0, 0], sizes = [2, 2, 8, 8], strides = [1, 1, 1, 1]} : vector<2x2x24x24xf32> to vector<2x2x8x8xf32>
    %13 = vector.extract_strided_slice %11 {offsets = [0, 0, 0, 8], sizes = [2, 2, 8, 8], strides = [1, 1, 1, 1]} : vector<2x2x24x24xf32> to vector<2x2x8x8xf32>
    %14 = vector.extract_strided_slice %11 {offsets = [0, 0, 0, 16], sizes = [2, 2, 8, 8], strides = [1, 1, 1, 1]} : vector<2x2x24x24xf32> to vector<2x2x8x8xf32>
    %15 = vector.extract_strided_slice %11 {offsets = [0, 0, 8, 0], sizes = [2, 2, 8, 8], strides = [1, 1, 1, 1]} : vector<2x2x24x24xf32> to vector<2x2x8x8xf32>
    %16 = vector.extract_strided_slice %11 {offsets = [0, 0, 8, 8], sizes = [2, 2, 8, 8], strides = [1, 1, 1, 1]} : vector<2x2x24x24xf32> to vector<2x2x8x8xf32>
    %17 = vector.extract_strided_slice %11 {offsets = [0, 0, 8, 16], sizes = [2, 2, 8, 8], strides = [1, 1, 1, 1]} : vector<2x2x24x24xf32> to vector<2x2x8x8xf32>
    %18 = vector.extract_strided_slice %11 {offsets = [0, 0, 16, 0], sizes = [2, 2, 8, 8], strides = [1, 1, 1, 1]} : vector<2x2x24x24xf32> to vector<2x2x8x8xf32>
    %19 = vector.extract_strided_slice %11 {offsets = [0, 0, 16, 8], sizes = [2, 2, 8, 8], strides = [1, 1, 1, 1]} : vector<2x2x24x24xf32> to vector<2x2x8x8xf32>
    %20 = vector.extract_strided_slice %11 {offsets = [0, 0, 16, 16], sizes = [2, 2, 8, 8], strides = [1, 1, 1, 1]} : vector<2x2x24x24xf32> to vector<2x2x8x8xf32>
    %21 = tpu.concatenate %12, %13, %14, %15, %16, %17, %18, %19, %20 in 1 : vector<2x2x8x8xf32>, vector<2x2x8x8xf32>, vector<2x2x8x8xf32>, vector<2x2x8x8xf32>, vector<2x2x8x8xf32>, vector<2x2x8x8xf32>, vector<2x2x8x8xf32>, vector<2x2x8x8xf32>, vector<2x2x8x8xf32> -> vector<2x18x8x8xf32>
    %22 = vector.shape_cast %21 : vector<2x18x8x8xf32> to vector<2x18x64xf32>
    %c0_8 = arith.constant 0 : index
    %c0_9 = arith.constant 0 : index
    %23 = vector.load %arg5[%c0_8, %c0_9] : memref<2x18xf32, #tpu.memory_space<vmem>>, vector<2x18xf32>
    %24 = vector.shape_cast %23 : vector<2x18xf32> to vector<1x2x18xf32>
    %25 = vector.shape_cast %24 : vector<1x2x18xf32> to vector<1x2x18xf32>
    %26 = vector.broadcast %25 : vector<1x2x18xf32> to vector<2x2x18xf32>
    %cst_10 = arith.constant dense<0.000000e+00> : vector<2x2x64xf32>
    %27 = tpu.matmul %26, %22, %cst_10 {dimension_numbers = #tpu.dot_dimension_numbers<[2], [1], [1], [2], [0, 0, 0, 1, 1, 2], [0], [0]>} : vector<2x2x18xf32>, vector<2x18x64xf32>, vector<2x2x64xf32> -> vector<2x2x64xf32>
    %c0_11 = arith.constant 0 : index
    %c0_12 = arith.constant 0 : index
    %c0_13 = arith.constant 0 : index
    %28 = vector.load %arg6[%c0_11, %c0_12, %c0_13] : memref<1x2x1xf32, #tpu.memory_space<vmem>>, vector<1x2x1xf32>
    %29 = vector.broadcast %28 : vector<1x2x1xf32> to vector<2x2x64xf32>
    %30 = arith.addf %27, %29 : vector<2x2x64xf32>
    %31 = arith.negf %30 : vector<2x2x64xf32>
    %32 = math.exp %31 : vector<2x2x64xf32>
    %cst_14 = arith.constant 1.000000e+00 : f32
    %33 = vector.broadcast %cst_14 : f32 to vector<2x2x64xf32>
    %34 = arith.addf %33, %32 : vector<2x2x64xf32>
    %35 = arith.divf %33, %34 : vector<2x2x64xf32>
    %36 = arith.mulf %30, %35 : vector<2x2x64xf32>
    %37 = vector.extract_strided_slice %10 {offsets = [0, 2, 0, 0], sizes = [2, 2, 24, 24], strides = [1, 1, 1, 1]} : vector<2x4x24x24xf32> to vector<2x2x24x24xf32>
    %c0_15 = arith.constant 0 : index
    %c0_16 = arith.constant 0 : index
    %38 = vector.load %arg4[%c0_15, %c0_16] : memref<24x24xf32, #tpu.memory_space<vmem>>, vector<24x24xf32>
    %39 = vector.shape_cast %38 : vector<24x24xf32> to vector<1x1x24x24xf32>
    %40 = vector.broadcast %39 : vector<1x1x24x24xf32> to vector<2x2x24x24xf32>
    %41 = arith.addf %37, %40 : vector<2x2x24x24xf32>
    %42 = vector.extract_strided_slice %41 {offsets = [0, 0, 0, 0], sizes = [2, 2, 8, 8], strides = [1, 1, 1, 1]} : vector<2x2x24x24xf32> to vector<2x2x8x8xf32>
    %43 = vector.extract_strided_slice %41 {offsets = [0, 0, 0, 8], sizes = [2, 2, 8, 8], strides = [1, 1, 1, 1]} : vector<2x2x24x24xf32> to vector<2x2x8x8xf32>
    %44 = arith.maximumf %42, %43 : vector<2x2x8x8xf32>
    %45 = vector.extract_strided_slice %41 {offsets = [0, 0, 0, 16], sizes = [2, 2, 8, 8], strides = [1, 1, 1, 1]} : vector<2x2x24x24xf32> to vector<2x2x8x8xf32>
    %46 = arith.maximumf %44, %45 : vector<2x2x8x8xf32>
    %47 = vector.extract_strided_slice %41 {offsets = [0, 0, 8, 0], sizes = [2, 2, 8, 8], strides = [1, 1, 1, 1]} : vector<2x2x24x24xf32> to vector<2x2x8x8xf32>
    %48 = arith.maximumf %46, %47 : vector<2x2x8x8xf32>
    %49 = vector.extract_strided_slice %41 {offsets = [0, 0, 8, 8], sizes = [2, 2, 8, 8], strides = [1, 1, 1, 1]} : vector<2x2x24x24xf32> to vector<2x2x8x8xf32>
    %50 = arith.maximumf %48, %49 : vector<2x2x8x8xf32>
    %51 = vector.extract_strided_slice %41 {offsets = [0, 0, 8, 16], sizes = [2, 2, 8, 8], strides = [1, 1, 1, 1]} : vector<2x2x24x24xf32> to vector<2x2x8x8xf32>
    %52 = arith.maximumf %50, %51 : vector<2x2x8x8xf32>
    %53 = vector.extract_strided_slice %41 {offsets = [0, 0, 16, 0], sizes = [2, 2, 8, 8], strides = [1, 1, 1, 1]} : vector<2x2x24x24xf32> to vector<2x2x8x8xf32>
    %54 = arith.maximumf %52, %53 : vector<2x2x8x8xf32>
    %55 = vector.extract_strided_slice %41 {offsets = [0, 0, 16, 8], sizes = [2, 2, 8, 8], strides = [1, 1, 1, 1]} : vector<2x2x24x24xf32> to vector<2x2x8x8xf32>
    %56 = arith.maximumf %54, %55 : vector<2x2x8x8xf32>
    %57 = vector.extract_strided_slice %41 {offsets = [0, 0, 16, 16], sizes = [2, 2, 8, 8], strides = [1, 1, 1, 1]} : vector<2x2x24x24xf32> to vector<2x2x8x8xf32>
    %58 = arith.maximumf %56, %57 : vector<2x2x8x8xf32>
    %59 = vector.shape_cast %58 : vector<2x2x8x8xf32> to vector<2x2x64xf32>
    %c0_17 = arith.constant 0 : index
    %c0_18 = arith.constant 0 : index
    %60 = vector.load %arg7[%c0_17, %c0_18] : memref<2x2xf32, #tpu.memory_space<vmem>>, vector<2x2xf32>
    %61 = vector.shape_cast %60 : vector<2x2xf32> to vector<1x2x2xf32>
    %62 = vector.shape_cast %61 : vector<1x2x2xf32> to vector<1x2x2xf32>
    %63 = vector.broadcast %62 : vector<1x2x2xf32> to vector<2x2x2xf32>
    %cst_19 = arith.constant dense<0.000000e+00> : vector<2x2x64xf32>
    %64 = tpu.matmul %63, %59, %cst_19 {dimension_numbers = #tpu.dot_dimension_numbers<[2], [1], [1], [2], [0, 0, 0, 1, 1, 2], [0], [0]>} : vector<2x2x2xf32>, vector<2x2x64xf32>, vector<2x2x64xf32> -> vector<2x2x64xf32>
    %c0_20 = arith.constant 0 : index
    %c0_21 = arith.constant 0 : index
    %c0_22 = arith.constant 0 : index
    %65 = vector.load %arg8[%c0_20, %c0_21, %c0_22] : memref<1x2x1xf32, #tpu.memory_space<vmem>>, vector<1x2x1xf32>
    %66 = vector.broadcast %65 : vector<1x2x1xf32> to vector<2x2x64xf32>
    %67 = arith.addf %64, %66 : vector<2x2x64xf32>
    %68 = arith.negf %67 : vector<2x2x64xf32>
    %69 = math.exp %68 : vector<2x2x64xf32>
    %cst_23 = arith.constant 1.000000e+00 : f32
    %70 = vector.broadcast %cst_23 : f32 to vector<2x2x64xf32>
    %71 = arith.addf %70, %69 : vector<2x2x64xf32>
    %72 = arith.divf %70, %71 : vector<2x2x64xf32>
    %73 = arith.mulf %67, %72 : vector<2x2x64xf32>
    %c0_24 = arith.constant 0 : index
    %c0_25 = arith.constant 0 : index
    %c0_26 = arith.constant 0 : index
    %74 = vector.load %arg9[%c0_24, %c0_25, %c0_26] : memref<2x4x64xf32, #tpu.memory_space<vmem>>, vector<2x2x64xf32>
    tpu.vector_store %arg9[%c0_24, %c0_25, %c0_26], %36 {strides = array<i32>} : memref<2x4x64xf32, #tpu.memory_space<vmem>>, vector<2x2x64xf32>,
    %c0_27 = arith.constant 0 : index
    %c2 = arith.constant 2 : index
    %c0_28 = arith.constant 0 : index
    %75 = vector.load %arg9[%c0_27, %c2, %c0_28] : memref<2x4x64xf32, #tpu.memory_space<vmem>>, vector<2x2x64xf32>
    tpu.vector_store %arg9[%c0_27, %c2, %c0_28], %73 {strides = array<i32>} : memref<2x4x64xf32, #tpu.memory_space<vmem>>, vector<2x2x64xf32>,
    return
  }
  func.func @transform_0(%arg0: i32) -> (i32, i32, i32, i32) {
    %c0_i32 = arith.constant 0 : i32
    %c0_i32_0 = arith.constant 0 : i32
    %c0_i32_1 = arith.constant 0 : i32
    %c0_i32_2 = arith.constant 0 : i32
    return %arg0, %c0_i32, %c0_i32_0, %c0_i32_1 : i32, i32, i32, i32
  }
  func.func @transform_1(%arg0: i32) -> (i32, i32) {
    %c0_i32 = arith.constant 0 : i32
    %c0_i32_0 = arith.constant 0 : i32
    %c0_i32_1 = arith.constant 0 : i32
    return %c0_i32, %c0_i32_0 : i32, i32
  }
  func.func @transform_2(%arg0: i32) -> (i32, i32) {
    %c0_i32 = arith.constant 0 : i32
    %c0_i32_0 = arith.constant 0 : i32
    %c0_i32_1 = arith.constant 0 : i32
    return %c0_i32, %c0_i32_0 : i32, i32
  }
  func.func @transform_3(%arg0: i32) -> (i32, i32) {
    %c0_i32 = arith.constant 0 : i32
    %c0_i32_0 = arith.constant 0 : i32
    %c0_i32_1 = arith.constant 0 : i32
    return %c0_i32, %c0_i32_0 : i32, i32
  }
  func.func @transform_4(%arg0: i32) -> (i32, i32) {
    %c0_i32 = arith.constant 0 : i32
    %c0_i32_0 = arith.constant 0 : i32
    %c0_i32_1 = arith.constant 0 : i32
    return %c0_i32, %c0_i32_0 : i32, i32
  }
  func.func @transform_5(%arg0: i32) -> (i32, i32, i32) {
    %c0_i32 = arith.constant 0 : i32
    %c0_i32_0 = arith.constant 0 : i32
    %c0_i32_1 = arith.constant 0 : i32
    %c0_i32_2 = arith.constant 0 : i32
    return %c0_i32, %c0_i32_0, %c0_i32_1 : i32, i32, i32
  }
  func.func @transform_6(%arg0: i32) -> (i32, i32) {
    %c0_i32 = arith.constant 0 : i32
    %c0_i32_0 = arith.constant 0 : i32
    %c0_i32_1 = arith.constant 0 : i32
    return %c0_i32, %c0_i32_0 : i32, i32
  }
  func.func @transform_7(%arg0: i32) -> (i32, i32, i32) {
    %c0_i32 = arith.constant 0 : i32
    %c0_i32_0 = arith.constant 0 : i32
    %c0_i32_1 = arith.constant 0 : i32
    %c0_i32_2 = arith.constant 0 : i32
    return %c0_i32, %c0_i32_0, %c0_i32_1 : i32, i32, i32
  }
  func.func @transform_8(%arg0: i32) -> (i32, i32, i32) {
    %c0_i32 = arith.constant 0 : i32
    %c0_i32_0 = arith.constant 0 : i32
    %c0_i32_1 = arith.constant 0 : i32
    return %arg0, %c0_i32, %c0_i32_0 : i32, i32, i32
  }
}

</mosaic_0001>

<llo_original>
// kernel: tpu_custom_call.1
$region0: #{tpu_custom_call.1}
  #allocation0 [shape = 'u32[]', space=smem, size = 0x4, offset = 0x4, fixed_abs, tag = 'smem constant byte address 0x4 - core index']
  #allocation1 [shape = 'u32[144,128]{1,0:T(1,128)}', space=vmem, size = 0x12000, scoped, tag = 'internal scratch']
  %s0 = inlined_call_operand.hbm [shape: f32[2,4,16,16], index: 0, kind: input, shape index: {}]
  %s1 = inlined_call_operand.vmem [shape: f32[16,24], index: 1, kind: input, shape index: {}]
  %s2 = inlined_call_operand.vmem [shape: f32[24,16], index: 2, kind: input, shape index: {}]
  %s3 = inlined_call_operand.vmem [shape: f32[24,24], index: 3, kind: input, shape index: {}]
  %s4 = inlined_call_operand.vmem [shape: f32[2,18], index: 4, kind: input, shape index: {}]
  %s5 = inlined_call_operand.vmem [shape: f32[1,2,1], index: 5, kind: input, shape index: {}]
  %s6 = inlined_call_operand.vmem [shape: f32[2,2], index: 6, kind: input, shape index: {}]
  %s7 = inlined_call_operand.vmem [shape: f32[1,2,1], index: 7, kind: input, shape index: {}]
  %s8 = inlined_call_operand.hbm [shape: f32[2,4,64], index: 8, kind: output, shape index: {}]
  %s9 = sld [smem:[#allocation0]]
  $region46: #{tpu_custom_call.1} parent=0
    _
  %s11 = ssub.s32 1, %s9
  %s12 = scalar_select 0, %s11, %s9
  $region1: #{tpu_custom_call.1} parent=0
    #allocation2 [shape = 'u8[65536]{0}', space=vmem, size = 0x10000, scoped, tag = 'input window, operand 0, single buffered']
    #allocation3 [shape = 's32[1]{0}', space=sflag, size = 0x4, scoped, tag = 'scoped memory for tpu_custom_call.1']
    #allocation4 [shape = 's32[1]{0}', space=sflag, size = 0x4, scoped, tag = 'scoped memory for tpu_custom_call.1']
    #allocation5 [shape = 'u8[4096]{0}', space=vmem, size = 0x1000, scoped, tag = 'output window, operand 0, single buffered']
    %13 = vsyncpa [#allocation3], 0
    %14 = vsyncpa [#allocation4], 0
    // Predicated region
    $region2: #{tpu_custom_call.1} parent=1 // pred_check
      _
    $region3: #{tpu_custom_call.1} parent=1 // pred_check_branch
      %16 = sbr.rel (0) target = $region5
    $region4: #{tpu_custom_call.1} parent=1 // pred_region
      %s18 = ssub.s32 2048, 2048
      %19 = vsyncadd [#allocation3], %s18
      %s20 = sshll.u32 [#allocation2], 4
      %s21 = int_to_ptr.vmem [resolvable:$true] %s20
      %26 = dma.hbm_to_vmem [thread:$0]  %s0, 2048, %s21, [#allocation3], 128, 128, 8
    $region5: #{tpu_custom_call.1} parent=1 // pred_fallthru
      _
    // Predicated region
    $region6: #{tpu_custom_call.1} parent=1 // pred_check
      _
    $region7: #{tpu_custom_call.1} parent=1 // pred_check_branch
      %28 = sbr.rel (0) target = $region9
    $region8: #{tpu_custom_call.1} parent=1 // pred_region
      _
    $region9: #{tpu_custom_call.1} parent=1 // pred_fallthru
      _
    // Predicated region
    $region10: #{tpu_custom_call.1} parent=1 // pred_check
      _
    $region11: #{tpu_custom_call.1} parent=1 // pred_check_branch
      %30 = sbr.rel (0) target = $region13
    $region12: #{tpu_custom_call.1} parent=1 // pred_region
      _
    $region13: #{tpu_custom_call.1} parent=1 // pred_fallthru
      _
    // Predicated region
    $region14: #{tpu_custom_call.1} parent=1 // pred_check
      _
    $region15: #{tpu_custom_call.1} parent=1 // pred_check_branch
      %32 = sbr.rel (0) target = $region17
    $region16: #{tpu_custom_call.1} parent=1 // pred_region
      _
    $region17: #{tpu_custom_call.1} parent=1 // pred_fallthru
      _
    // Predicated region
    $region18: #{tpu_custom_call.1} parent=1 // pred_check
      _
    $region19: #{tpu_custom_call.1} parent=1 // pred_check_branch
      %34 = sbr.rel (0) target = $region21
    $region20: #{tpu_custom_call.1} parent=1 // pred_region
      _
    $region21: #{tpu_custom_call.1} parent=1 // pred_fallthru
      _
    // Predicated region
    $region22: #{tpu_custom_call.1} parent=1 // pred_check
      _
    $region23: #{tpu_custom_call.1} parent=1 // pred_check_branch
      %36 = sbr.rel (0) target = $region25
    $region24: #{tpu_custom_call.1} parent=1 // pred_region
      _
    $region25: #{tpu_custom_call.1} parent=1 // pred_fallthru
      _
    // Predicated region
    $region26: #{tpu_custom_call.1} parent=1 // pred_check
      _
    $region27: #{tpu_custom_call.1} parent=1 // pred_check_branch
      %38 = sbr.rel (0) target = $region29
    $region28: #{tpu_custom_call.1} parent=1 // pred_region
      _
    $region29: #{tpu_custom_call.1} parent=1 // pred_fallthru
      _
    // Predicated region
    $region30: #{tpu_custom_call.1} parent=1 // pred_check
      _
    $region31: #{tpu_custom_call.1} parent=1 // pred_check_branch
      %40 = sbr.rel (0) target = $region33
    $region32: #{tpu_custom_call.1} parent=1 // pred_region
      _
    $region33: #{tpu_custom_call.1} parent=1 // pred_fallthru
      _
    // Predicated region
    $region34: #{tpu_custom_call.1} parent=1 // pred_check
      _
    $region35: #{tpu_custom_call.1} parent=1 // pred_check_branch
      %42 = sbr.rel (0) target = $region37
    $region36: #{tpu_custom_call.1} parent=1 // pred_region
      %43 = dma.done [#allocation3], 2048
    $region37: #{tpu_custom_call.1} parent=1 // pred_fallthru
      _
    %v44 = vld [vmem:[#allocation2] sm:$0xff]
    %v45 = vld [vmem:[#allocation2 + $0x8] sm:$0xff]
    %v46 = vld [vmem:[#allocation2 + $0x10] sm:$0xff]
    %v47 = vld [vmem:[#allocation2 + $0x18] sm:$0xff]
    %v48 = vld [vmem:[#allocation2 + $0x20] sm:$0xff]
    %v49 = vld [vmem:[#allocation2 + $0x28] sm:$0xff]
    %v50 = vld [vmem:[#allocation2 + $0x30] sm:$0xff]
    %v51 = vld [vmem:[#allocation2 + $0x38] sm:$0xff]
    %v52 = vld [vmem:[#allocation2 + $0x40] sm:$0xff]
    %v53 = vld [vmem:[#allocation2 + $0x48] sm:$0xff]
    %v54 = vld [vmem:[#allocation2 + $0x50] sm:$0xff]
    %v55 = vld [vmem:[#allocation2 + $0x58] sm:$0xff]
    %v56 = vld [vmem:[#allocation2 + $0x60] sm:$0xff]
    %v57 = vld [vmem:[#allocation2 + $0x68] sm:$0xff]
    %v58 = vld [vmem:[#allocation2 + $0x70] sm:$0xff]
    %v59 = vld [vmem:[#allocation2 + $0x78] sm:$0xff]
    %v60 = vld [vmem:[%s1] sm:$0xff]
    %v61 = vld [vmem:[%s1 + $0x8] sm:$0xff]
    %vm62 = vcmask 130048
    %v64 = vsel %vm62, %v44, 0
    %v67 = vsel %vm62, %v45, 0
    %v70 = vsel %vm62, %v46, 0
    %v73 = vsel %vm62, %v47, 0
    %v76 = vsel %vm62, %v48, 0
    %v79 = vsel %vm62, %v49, 0
    %v82 = vsel %vm62, %v50, 0
    %v85 = vsel %vm62, %v51, 0
    %v88 = vsel %vm62, %v52, 0
    %v91 = vsel %vm62, %v53, 0
    %v94 = vsel %vm62, %v54, 0
    %v97 = vsel %vm62, %v55, 0
    %v100 = vsel %vm62, %v56, 0
    %v103 = vsel %vm62, %v57, 0
    %v106 = vsel %vm62, %v58, 0
    %v109 = vsel %vm62, %v59, 0
    %111 = vmatprep.subr.mxu0 0.0
    %112 = vmatpush1.msra.mxu0 %v60
    %113 = vmatprep.subr.mxu0 0.0
    %114 = vmatpush1.msra.mxu0 %v61
    %115 = vmatprep.subr.mxu0 0.0
    %116 = vmatpush1.msra.mxu0 0.0
    %117 = vmatprep.subr.mxu0 0.0
    %118 = vmatpush1.msra.mxu0 0.0
    %119 = vmatprep.subr.mxu0 0.0
    %120 = vmatpush1.msra.mxu0 0.0
    %121 = vmatprep.subr.mxu0 0.0
    %122 = vmatpush1.msra.mxu0 0.0
    %123 = vmatprep.subr.mxu0 0.0
    %124 = vmatpush1.msra.mxu0 0.0
    %125 = vmatprep.subr.mxu0 0.0
    %126 = vmatpush1.msra.mxu0 0.0
    %127 = vmatprep.subr.mxu0 0.0
    %128 = vmatpush1.msra.mxu0 0.0
    %129 = vmatprep.subr.mxu0 0.0
    %130 = vmatpush1.msra.mxu0 0.0
    %131 = vmatprep.subr.mxu0 0.0
    %132 = vmatpush1.msra.mxu0 0.0
    %133 = vmatprep.subr.mxu0 0.0
    %134 = vmatpush1.msra.mxu0 0.0
    %135 = vmatprep.subr.mxu0 0.0
    %136 = vmatpush1.msra.mxu0 0.0
    %137 = vmatprep.subr.mxu0 0.0
    %138 = vmatpush1.msra.mxu0 0.0
    %139 = vmatprep.subr.mxu0 0.0
    %140 = vmatpush1.msra.mxu0 0.0
    %141 = vmatprep.subr.mxu0 0.0
    %142 = vmatpush1.msra.mxu0 0.0
    %143 = vmatprep.subr.mxu0 0.0
    %144 = vmatpush1.msra.mxu0 0.0
    %145 = vmatprep.subr.mxu0 0.0
    %146 = vmatpush1.msra.mxu0 0.0
    %147 = vmatprep.subr.mxu0 0.0
    %148 = vmatpush1.msra.mxu0 0.0
    %149 = vmatprep.subr.mxu0 0.0
    %150 = vmatpush1.msra.mxu0 0.0
    %151 = vmatprep.subr.mxu0 0.0
    %152 = vmatpush1.msra.mxu0 0.0
    %153 = vmatprep.subr.mxu0 0.0
    %154 = vmatpush1.msra.mxu0 0.0
    %155 = vmatprep.subr.mxu0 0.0
    %156 = vmatpush1.msra.mxu0 0.0
    %157 = vmatprep.subr.mxu0 0.0
    %158 = vmatpush1.msra.mxu0 0.0
    %159 = vmatprep.subr.mxu0 0.0
    %160 = vmatpush1.msra.mxu0 0.0
    %161 = vmatprep.subr.mxu0 0.0
    %162 = vmatpush1.msra.mxu0 0.0
    %163 = vmatprep.subr.mxu0 0.0
    %164 = vmatpush1.msra.mxu0 0.0
    %165 = vmatprep.subr.mxu0 0.0
    %166 = vmatpush1.msra.mxu0 0.0
    %167 = vmatprep.subr.mxu0 0.0
    %168 = vmatpush1.msra.mxu0 0.0
    %169 = vmatprep.subr.mxu0 0.0
    %170 = vmatpush1.msra.mxu0 0.0
    %171 = vmatprep.subr.mxu0 0.0
    %172 = vmatpush1.msra.mxu0 0.0
    %173 = vmatprep.subr.mxu0 0.0
    %174 = vmatpush1.msra.mxu0 0.0
    %175 = vmatprep.mubr.f32.mxu0 0.0
    %176 = vmatmul.mubr.f32.gmra.mrb[0].mxu0 %v64
    %v177 = vpop.f32.mrb[0].mxu0
    %v178 = vadd.f32 0.0, %v177
    %v179 = vpop.f32.mrb[0].mxu0
    %180 = vmatprep.mubr.f32.mxu0 0.0
    %181 = vmatmul.mubr.f32.gmra.mrb[0].mxu0 %v67
    %v182 = vpop.f32.mrb[0].mxu0
    %v183 = vadd.f32 0.0, %v182
    %v184 = vpop.f32.mrb[0].mxu0
    %185 = vmatprep.mubr.f32.mxu0 0.0
    %186 = vmatmul.mubr.f32.gmra.mrb[0].mxu0 %v70
    %v187 = vpop.f32.mrb[0].mxu0
    %v188 = vadd.f32 0.0, %v187
    %v189 = vpop.f32.mrb[0].mxu0
    %190 = vmatprep.mubr.f32.mxu0 0.0
    %191 = vmatmul.mubr.f32.gmra.mrb[0].mxu0 %v73
    %v192 = vpop.f32.mrb[0].mxu0
    %v193 = vadd.f32 0.0, %v192
    %v194 = vpop.f32.mrb[0].mxu0
    %195 = vmatprep.mubr.f32.mxu0 0.0
    %196 = vmatmul.mubr.f32.gmra.mrb[0].mxu0 %v76
    %v197 = vpop.f32.mrb[0].mxu0
    %v198 = vadd.f32 0.0, %v197
    %v199 = vpop.f32.mrb[0].mxu0
    %200 = vmatprep.mubr.f32.mxu0 0.0
    %201 = vmatmul.mubr.f32.gmra.mrb[0].mxu0 %v79
    %v202 = vpop.f32.mrb[0].mxu0
    %v203 = vadd.f32 0.0, %v202
    %v204 = vpop.f32.mrb[0].mxu0
    %205 = vmatprep.mubr.f32.mxu0 0.0
    %206 = vmatmul.mubr.f32.gmra.mrb[0].mxu0 %v82
    %v207 = vpop.f32.mrb[0].mxu0
    %v208 = vadd.f32 0.0, %v207
    %v209 = vpop.f32.mrb[0].mxu0
    %210 = vmatprep.mubr.f32.mxu0 0.0
    %211 = vmatmul.mubr.f32.gmra.mrb[0].mxu0 %v85
    %v212 = vpop.f32.mrb[0].mxu0
    %v213 = vadd.f32 0.0, %v212
    %v214 = vpop.f32.mrb[0].mxu0
    %215 = vmatprep.mubr.f32.mxu0 0.0
    %216 = vmatmul.mubr.f32.gmra.mrb[0].mxu0 %v88
    %v217 = vpop.f32.mrb[0].mxu0
    %v218 = vadd.f32 0.0, %v217
    %v219 = vpop.f32.mrb[0].mxu0
    %220 = vmatprep.mubr.f32.mxu0 0.0
    %221 = vmatmul.mubr.f32.gmra.mrb[0].mxu0 %v91
    %v222 = vpop.f32.mrb[0].mxu0
    %v223 = vadd.f32 0.0, %v222
    %v224 = vpop.f32.mrb[0].mxu0
    %225 = vmatprep.mubr.f32.mxu0 0.0
    %226 = vmatmul.mubr.f32.gmra.mrb[0].mxu0 %v94
    %v227 = vpop.f32.mrb[0].mxu0
    %v228 = vadd.f32 0.0, %v227
    %v229 = vpop.f32.mrb[0].mxu0
    %230 = vmatprep.mubr.f32.mxu0 0.0
    %231 = vmatmul.mubr.f32.gmra.mrb[0].mxu0 %v97
    %v232 = vpop.f32.mrb[0].mxu0
    %v233 = vadd.f32 0.0, %v232
    %v234 = vpop.f32.mrb[0].mxu0
    %235 = vmatprep.mubr.f32.mxu0 0.0
    %236 = vmatmul.mubr.f32.gmra.mrb[0].mxu0 %v100
    %v237 = vpop.f32.mrb[0].mxu0
    %v238 = vadd.f32 0.0, %v237
    %v239 = vpop.f32.mrb[0].mxu0
    %240 = vmatprep.mubr.f32.mxu0 0.0
    %241 = vmatmul.mubr.f32.gmra.mrb[0].mxu0 %v103
    %v242 = vpop.f32.mrb[0].mxu0
    %v243 = vadd.f32 0.0, %v242
    %v244 = vpop.f32.mrb[0].mxu0
    %245 = vmatprep.mubr.f32.mxu0 0.0
    %246 = vmatmul.mubr.f32.gmra.mrb[0].mxu0 %v106
    %v247 = vpop.f32.mrb[0].mxu0
    %v248 = vadd.f32 0.0, %v247
    %v249 = vpop.f32.mrb[0].mxu0
    %250 = vmatprep.mubr.f32.mxu0 0.0
    %251 = vmatmul.mubr.f32.gmra.mrb[0].mxu0 %v109
    %v252 = vpop.f32.mrb[0].mxu0
    %v253 = vadd.f32 0.0, %v252
    %v254 = vpop.f32.mrb[0].mxu0
    %255 = vdwg.mxu0
    %v256 = vld [vmem:[%s2] sm:$0xff]
    %v257 = vld [vmem:[%s2 + $0x8] sm:$0xff]
    %v258 = vld [vmem:[%s2 + $0x10] sm:$0xff]
    %v260 = vsel %vm62, %v256, 0
    %v263 = vsel %vm62, %v257, 0
    %v266 = vsel %vm62, %v258, 0
    %268 = vmatprep.subr.mxu0 0.0
    %269 = vmatpush1.msra.mxu0 %v178
    %270 = vmatprep.subr.mxu0 0.0
    %271 = vmatpush1.msra.mxu0 %v183
    %272 = vmatprep.subr.mxu0 0.0
    %273 = vmatpush1.msra.mxu0 0.0
    %274 = vmatprep.subr.mxu0 0.0
    %275 = vmatpush1.msra.mxu0 0.0
    %276 = vmatprep.subr.mxu0 0.0
    %277 = vmatpush1.msra.mxu0 0.0
    %278 = vmatprep.subr.mxu0 0.0
    %279 = vmatpush1.msra.mxu0 0.0
    %280 = vmatprep.subr.mxu0 0.0
    %281 = vmatpush1.msra.mxu0 0.0
    %282 = vmatprep.subr.mxu0 0.0
    %283 = vmatpush1.msra.mxu0 0.0
    %284 = vmatprep.subr.mxu0 0.0
    %285 = vmatpush1.msra.mxu0 0.0
    %286 = vmatprep.subr.mxu0 0.0
    %287 = vmatpush1.msra.mxu0 0.0
    %288 = vmatprep.subr.mxu0 0.0
    %289 = vmatpush1.msra.mxu0 0.0
    %290 = vmatprep.subr.mxu0 0.0
    %291 = vmatpush1.msra.mxu0 0.0
    %292 = vmatprep.subr.mxu0 0.0
    %293 = vmatpush1.msra.mxu0 0.0
    %294 = vmatprep.subr.mxu0 0.0
    %295 = vmatpush1.msra.mxu0 0.0
    %296 = vmatprep.subr.mxu0 0.0
    %297 = vmatpush1.msra.mxu0 0.0
    %298 = vmatprep.subr.mxu0 0.0
    %299 = vmatpush1.msra.mxu0 0.0
    %300 = vmatprep.subr.mxu0 0.0
    %301 = vmatpush1.msra.mxu0 0.0
    %302 = vmatprep.subr.mxu0 0.0
    %303 = vmatpush1.msra.mxu0 0.0
    %304 = vmatprep.subr.mxu0 0.0
    %305 = vmatpush1.msra.mxu0 0.0
    %306 = vmatprep.subr.mxu0 0.0
    %307 = vmatpush1.msra.mxu0 0.0
    %308 = vmatprep.subr.mxu0 0.0
    %309 = vmatpush1.msra.mxu0 0.0
    %310 = vmatprep.subr.mxu0 0.0
    %311 = vmatpush1.msra.mxu0 0.0
    %312 = vmatprep.subr.mxu0 0.0
    %313 = vmatpush1.msra.mxu0 0.0
    %314 = vmatprep.subr.mxu0 0.0
    %315 = vmatpush1.msra.mxu0 0.0
    %316 = vmatprep.subr.mxu0 0.0
    %317 = vmatpush1.msra.mxu0 0.0
    %318 = vmatprep.subr.mxu0 0.0
    %319 = vmatpush1.msra.mxu0 0.0
    %320 = vmatprep.subr.mxu0 0.0
    %321 = vmatpush1.msra.mxu0 0.0
    %322 = vmatprep.subr.mxu0 0.0
    %323 = vmatpush1.msra.mxu0 0.0
    %324 = vmatprep.subr.mxu0 0.0
    %325 = vmatpush1.msra.mxu0 0.0
    %326 = vmatprep.subr.mxu0 0.0
    %327 = vmatpush1.msra.mxu0 0.0
    %328 = vmatprep.subr.mxu0 0.0
    %329 = vmatpush1.msra.mxu0 0.0
    %330 = vmatprep.subr.mxu0 0.0
    %331 = vmatpush1.msra.mxu0 0.0
    %332 = vmatprep.mubr.f32.mxu0 0.0
    %333 = vmatmul.mubr.f32.gmra.mrb[0].mxu0 %v260
    %v334 = vpop.f32.mrb[0].mxu0
    %v335 = vadd.f32 0.0, %v334
    %v336 = vpop.f32.mrb[0].mxu0
    %337 = vmatprep.mubr.f32.mxu0 0.0
    %338 = vmatmul.mubr.f32.gmra.mrb[0].mxu0 %v263
    %v339 = vpop.f32.mrb[0].mxu0
    %v340 = vadd.f32 0.0, %v339
    %v341 = vpop.f32.mrb[0].mxu0
    %342 = vmatprep.mubr.f32.mxu0 0.0
    %343 = vmatmul.mubr.f32.gmra.mrb[0].mxu0 %v266
    %v344 = vpop.f32.mrb[0].mxu0
    %v345 = vadd.f32 0.0, %v344
    %v346 = vpop.f32.mrb[0].mxu0
    %347 = vdwg.mxu0
    %348 = vmatprep.subr.mxu0 0.0
    %349 = vmatpush1.msra.mxu0 %v188
    %350 = vmatprep.subr.mxu0 0.0
    %351 = vmatpush1.msra.mxu0 %v193
    %352 = vmatprep.subr.mxu0 0.0
    %353 = vmatpush1.msra.mxu0 0.0
    %354 = vmatprep.subr.mxu0 0.0
    %355 = vmatpush1.msra.mxu0 0.0
    %356 = vmatprep.subr.mxu0 0.0
    %357 = vmatpush1.msra.mxu0 0.0
    %358 = vmatprep.subr.mxu0 0.0
    %359 = vmatpush1.msra.mxu0 0.0
    %360 = vmatprep.subr.mxu0 0.0
    %361 = vmatpush1.msra.mxu0 0.0
    %362 = vmatprep.subr.mxu0 0.0
    %363 = vmatpush1.msra.mxu0 0.0
    %364 = vmatprep.subr.mxu0 0.0
    %365 = vmatpush1.msra.mxu0 0.0
    %366 = vmatprep.subr.mxu0 0.0
    %367 = vmatpush1.msra.mxu0 0.0
    %368 = vmatprep.subr.mxu0 0.0
    %369 = vmatpush1.msra.mxu0 0.0
    %370 = vmatprep.subr.mxu0 0.0
    %371 = vmatpush1.msra.mxu0 0.0
    %372 = vmatprep.subr.mxu0 0.0
    %373 = vmatpush1.msra.mxu0 0.0
    %374 = vmatprep.subr.mxu0 0.0
    %375 = vmatpush1.msra.mxu0 0.0
    %376 = vmatprep.subr.mxu0 0.0
    %377 = vmatpush1.msra.mxu0 0.0
    %378 = vmatprep.subr.mxu0 0.0
    %379 = vmatpush1.msra.mxu0 0.0
    %380 = vmatprep.subr.mxu0 0.0
    %381 = vmatpush1.msra.mxu0 0.0
    %382 = vmatprep.subr.mxu0 0.0
    %383 = vmatpush1.msra.mxu0 0.0
    %384 = vmatprep.subr.mxu0 0.0
    %385 = vmatpush1.msra.mxu0 0.0
    %386 = vmatprep.subr.mxu0 0.0
    %387 = vmatpush1.msra.mxu0 0.0
    %388 = vmatprep.subr.mxu0 0.0
    %389 = vmatpush1.msra.mxu0 0.0
    %390 = vmatprep.subr.mxu0 0.0
    %391 = vmatpush1.msra.mxu0 0.0
    %392 = vmatprep.subr.mxu0 0.0
    %393 = vmatpush1.msra.mxu0 0.0
    %394 = vmatprep.subr.mxu0 0.0
    %395 = vmatpush1.msra.mxu0 0.0
    %396 = vmatprep.subr.mxu0 0.0
    %397 = vmatpush1.msra.mxu0 0.0
    %398 = vmatprep.subr.mxu0 0.0
    %399 = vmatpush1.msra.mxu0 0.0
    %400 = vmatprep.subr.mxu0 0.0
    %401 = vmatpush1.msra.mxu0 0.0
    %402 = vmatprep.subr.mxu0 0.0
    %403 = vmatpush1.msra.mxu0 0.0
    %404 = vmatprep.subr.mxu0 0.0
    %405 = vmatpush1.msra.mxu0 0.0
    %406 = vmatprep.subr.mxu0 0.0
    %407 = vmatpush1.msra.mxu0 0.0
    %408 = vmatprep.subr.mxu0 0.0
    %409 = vmatpush1.msra.mxu0 0.0
    %410 = vmatprep.subr.mxu0 0.0
    %411 = vmatpush1.msra.mxu0 0.0
    %412 = vmatprep.mubr.f32.mxu0 0.0
    %413 = vmatmul.mubr.f32.gmra.mrb[0].mxu0 %v260
    %v414 = vpop.f32.mrb[0].mxu0
    %v415 = vadd.f32 0.0, %v414
    %v416 = vpop.f32.mrb[0].mxu0
    %417 = vmatprep.mubr.f32.mxu0 0.0
    %418 = vmatmul.mubr.f32.gmra.mrb[0].mxu0 %v263
    %v419 = vpop.f32.mrb[0].mxu0
    %v420 = vadd.f32 0.0, %v419
    %v421 = vpop.f32.mrb[0].mxu0
    %422 = vmatprep.mubr.f32.mxu0 0.0
    %423 = vmatmul.mubr.f32.gmra.mrb[0].mxu0 %v266
    %v424 = vpop.f32.mrb[0].mxu0
    %v425 = vadd.f32 0.0, %v424
    %v426 = vpop.f32.mrb[0].mxu0
    %427 = vdwg.mxu0
    %428 = vmatprep.subr.mxu0 0.0
    %429 = vmatpush1.msra.mxu0 %v198
    %430 = vmatprep.subr.mxu0 0.0
    %431 = vmatpush1.msra.mxu0 %v203
    %432 = vmatprep.subr.mxu0 0.0
    %433 = vmatpush1.msra.mxu0 0.0
    %434 = vmatprep.subr.mxu0 0.0
    %435 = vmatpush1.msra.mxu0 0.0
    %436 = vmatprep.subr.mxu0 0.0
    %437 = vmatpush1.msra.mxu0 0.0
    %438 = vmatprep.subr.mxu0 0.0
    %439 = vmatpush1.msra.mxu0 0.0
    %440 = vmatprep.subr.mxu0 0.0
    %441 = vmatpush1.msra.mxu0 0.0
    %442 = vmatprep.subr.mxu0 0.0
    %443 = vmatpush1.msra.mxu0 0.0
    %444 = vmatprep.subr.mxu0 0.0
    %445 = vmatpush1.msra.mxu0 0.0
    %446 = vmatprep.subr.mxu0 0.0
    %447 = vmatpush1.msra.mxu0 0.0
    %448 = vmatprep.subr.mxu0 0.0
    %449 = vmatpush1.msra.mxu0 0.0
    %450 = vmatprep.subr.mxu0 0.0
    %451 = vmatpush1.msra.mxu0 0.0
    %452 = vmatprep.subr.mxu0 0.0
    %453 = vmatpush1.msra.mxu0 0.0
    %454 = vmatprep.subr.mxu0 0.0
    %455 = vmatpush1.msra.mxu0 0.0
    %456 = vmatprep.subr.mxu0 0.0
    %457 = vmatpush1.msra.mxu0 0.0
    %458 = vmatprep.subr.mxu0 0.0
    %459 = vmatpush1.msra.mxu0 0.0
    %460 = vmatprep.subr.mxu0 0.0
    %461 = vmatpush1.msra.mxu0 0.0
    %462 = vmatprep.subr.mxu0 0.0
    %463 = vmatpush1.msra.mxu0 0.0
    %464 = vmatprep.subr.mxu0 0.0
    %465 = vmatpush1.msra.mxu0 0.0
    %466 = vmatprep.subr.mxu0 0.0
    %467 = vmatpush1.msra.mxu0 0.0
    %468 = vmatprep.subr.mxu0 0.0
    %469 = vmatpush1.msra.mxu0 0.0
    %470 = vmatprep.subr.mxu0 0.0
    %471 = vmatpush1.msra.mxu0 0.0
    %472 = vmatprep.subr.mxu0 0.0
    %473 = vmatpush1.msra.mxu0 0.0
    %474 = vmatprep.subr.mxu0 0.0
    %475 = vmatpush1.msra.mxu0 0.0
    %476 = vmatprep.subr.mxu0 0.0
    %477 = vmatpush1.msra.mxu0 0.0
    %478 = vmatprep.subr.mxu0 0.0
    %479 = vmatpush1.msra.mxu0 0.0
    %480 = vmatprep.subr.mxu0 0.0
    %481 = vmatpush1.msra.mxu0 0.0
    %482 = vmatprep.subr.mxu0 0.0
    %483 = vmatpush1.msra.mxu0 0.0
    %484 = vmatprep.subr.mxu0 0.0
    %485 = vmatpush1.msra.mxu0 0.0
    %486 = vmatprep.subr.mxu0 0.0
    %487 = vmatpush1.msra.mxu0 0.0
    %488 = vmatprep.subr.mxu0 0.0
    %489 = vmatpush1.msra.mxu0 0.0
    %490 = vmatprep.subr.mxu0 0.0
    %491 = vmatpush1.msra.mxu0 0.0
    %492 = vmatprep.mubr.f32.mxu0 0.0
    %493 = vmatmul.mubr.f32.gmra.mrb[0].mxu0 %v260
    %v494 = vpop.f32.mrb[0].mxu0
    %v495 = vadd.f32 0.0, %v494
    %v496 = vpop.f32.mrb[0].mxu0
    %497 = vmatprep.mubr.f32.mxu0 0.0
    %498 = vmatmul.mubr.f32.gmra.mrb[0].mxu0 %v263
    %v499 = vpop.f32.mrb[0].mxu0
    %v500 = vadd.f32 0.0, %v499
    %v501 = vpop.f32.mrb[0].mxu0
    %502 = vmatprep.mubr.f32.mxu0 0.0
    %503 = vmatmul.mubr.f32.gmra.mrb[0].mxu0 %v266
    %v504 = vpop.f32.mrb[0].mxu0
    %v505 = vadd.f32 0.0, %v504
    %v506 = vpop.f32.mrb[0].mxu0
    %507 = vdwg.mxu0
    %508 = vmatprep.subr.mxu0 0.0
    %509 = vmatpush1.msra.mxu0 %v208
    %510 = vmatprep.subr.mxu0 0.0
    %511 = vmatpush1.msra.mxu0 %v213
    %512 = vmatprep.subr.mxu0 0.0
    %513 = vmatpush1.msra.mxu0 0.0
    %514 = vmatprep.subr.mxu0 0.0
    %515 = vmatpush1.msra.mxu0 0.0
    %516 = vmatprep.subr.mxu0 0.0
    %517 = vmatpush1.msra.mxu0 0.0
    %518 = vmatprep.subr.mxu0 0.0
    %519 = vmatpush1.msra.mxu0 0.0
    %520 = vmatprep.subr.mxu0 0.0
    %521 = vmatpush1.msra.mxu0 0.0
    %522 = vmatprep.subr.mxu0 0.0
    %523 = vmatpush1.msra.mxu0 0.0
    %524 = vmatprep.subr.mxu0 0.0
    %525 = vmatpush1.msra.mxu0 0.0
    %526 = vmatprep.subr.mxu0 0.0
    %527 = vmatpush1.msra.mxu0 0.0
    %528 = vmatprep.subr.mxu0 0.0
    %529 = vmatpush1.msra.mxu0 0.0
    %530 = vmatprep.subr.mxu0 0.0
    %531 = vmatpush1.msra.mxu0 0.0
    %532 = vmatprep.subr.mxu0 0.0
    %533 = vmatpush1.msra.mxu0 0.0
    %534 = vmatprep.subr.mxu0 0.0
    %535 = vmatpush1.msra.mxu0 0.0
    %536 = vmatprep.subr.mxu0 0.0
    %537 = vmatpush1.msra.mxu0 0.0
    %538 = vmatprep.subr.mxu0 0.0
    %539 = vmatpush1.msra.mxu0 0.0
    %540 = vmatprep.subr.mxu0 0.0
    %541 = vmatpush1.msra.mxu0 0.0
    %542 = vmatprep.subr.mxu0 0.0
    %543 = vmatpush1.msra.mxu0 0.0
    %544 = vmatprep.subr.mxu0 0.0
    %545 = vmatpush1.msra.mxu0 0.0
    %546 = vmatprep.subr.mxu0 0.0
    %547 = vmatpush1.msra.mxu0 0.0
    %548 = vmatprep.subr.mxu0 0.0
    %549 = vmatpush1.msra.mxu0 0.0
    %550 = vmatprep.subr.mxu0 0.0
    %551 = vmatpush1.msra.mxu0 0.0
    %552 = vmatprep.subr.mxu0 0.0
    %553 = vmatpush1.msra.mxu0 0.0
    %554 = vmatprep.subr.mxu0 0.0
    %555 = vmatpush1.msra.mxu0 0.0
    %556 = vmatprep.subr.mxu0 0.0
    %557 = vmatpush1.msra.mxu0 0.0
    %558 = vmatprep.subr.mxu0 0.0
    %559 = vmatpush1.msra.mxu0 0.0
    %560 = vmatprep.subr.mxu0 0.0
    %561 = vmatpush1.msra.mxu0 0.0
    %562 = vmatprep.subr.mxu0 0.0
    %563 = vmatpush1.msra.mxu0 0.0
    %564 = vmatprep.subr.mxu0 0.0
    %565 = vmatpush1.msra.mxu0 0.0
    %566 = vmatprep.subr.mxu0 0.0
    %567 = vmatpush1.msra.mxu0 0.0
    %568 = vmatprep.subr.mxu0 0.0
    %569 = vmatpush1.msra.mxu0 0.0
    %570 = vmatprep.subr.mxu0 0.0
    %571 = vmatpush1.msra.mxu0 0.0
    %572 = vmatprep.mubr.f32.mxu0 0.0
    %573 = vmatmul.mubr.f32.gmra.mrb[0].mxu0 %v260
    %v574 = vpop.f32.mrb[0].mxu0
    %v575 = vadd.f32 0.0, %v574
    %v576 = vpop.f32.mrb[0].mxu0
    %577 = vmatprep.mubr.f32.mxu0 0.0
    %578 = vmatmul.mubr.f32.gmra.mrb[0].mxu0 %v263
    %v579 = vpop.f32.mrb[0].mxu0
    %v580 = vadd.f32 0.0, %v579
    %v581 = vpop.f32.mrb[0].mxu0
    %582 = vmatprep.mubr.f32.mxu0 0.0
    %583 = vmatmul.mubr.f32.gmra.mrb[0].mxu0 %v266
    %v584 = vpop.f32.mrb[0].mxu0
    %v585 = vadd.f32 0.0, %v584
    %v586 = vpop.f32.mrb[0].mxu0
    %587 = vdwg.mxu0
    %588 = vmatprep.subr.mxu0 0.0
    %589 = vmatpush1.msra.mxu0 %v218
    %590 = vmatprep.subr.mxu0 0.0
    %591 = vmatpush1.msra.mxu0 %v223
    %592 = vmatprep.subr.mxu0 0.0
    %593 = vmatpush1.msra.mxu0 0.0
    %594 = vmatprep.subr.mxu0 0.0
    %595 = vmatpush1.msra.mxu0 0.0
    %596 = vmatprep.subr.mxu0 0.0
    %597 = vmatpush1.msra.mxu0 0.0
    %598 = vmatprep.subr.mxu0 0.0
    %599 = vmatpush1.msra.mxu0 0.0
    %600 = vmatprep.subr.mxu0 0.0
    %601 = vmatpush1.msra.mxu0 0.0
    %602 = vmatprep.subr.mxu0 0.0
    %603 = vmatpush1.msra.mxu0 0.0
    %604 = vmatprep.subr.mxu0 0.0
    %605 = vmatpush1.msra.mxu0 0.0
    %606 = vmatprep.subr.mxu0 0.0
    %607 = vmatpush1.msra.mxu0 0.0
    %608 = vmatprep.subr.mxu0 0.0
    %609 = vmatpush1.msra.mxu0 0.0
    %610 = vmatprep.subr.mxu0 0.0
    %611 = vmatpush1.msra.mxu0 0.0
    %612 = vmatprep.subr.mxu0 0.0
    %613 = vmatpush1.msra.mxu0 0.0
    %614 = vmatprep.subr.mxu0 0.0
    %615 = vmatpush1.msra.mxu0 0.0
    %616 = vmatprep.subr.mxu0 0.0
    %617 = vmatpush1.msra.mxu0 0.0
    %618 = vmatprep.subr.mxu0 0.0
    %619 = vmatpush1.msra.mxu0 0.0
    %620 = vmatprep.subr.mxu0 0.0
    %621 = vmatpush1.msra.mxu0 0.0
    %622 = vmatprep.subr.mxu0 0.0
    %623 = vmatpush1.msra.mxu0 0.0
    %624 = vmatprep.subr.mxu0 0.0
    %625 = vmatpush1.msra.mxu0 0.0
    %626 = vmatprep.subr.mxu0 0.0
    %627 = vmatpush1.msra.mxu0 0.0
    %628 = vmatprep.subr.mxu0 0.0
    %629 = vmatpush1.msra.mxu0 0.0
    %630 = vmatprep.subr.mxu0 0.0
    %631 = vmatpush1.msra.mxu0 0.0
    %632 = vmatprep.subr.mxu0 0.0
    %633 = vmatpush1.msra.mxu0 0.0
    %634 = vmatprep.subr.mxu0 0.0
    %635 = vmatpush1.msra.mxu0 0.0
    %636 = vmatprep.subr.mxu0 0.0
    %637 = vmatpush1.msra.mxu0 0.0
    %638 = vmatprep.subr.mxu0 0.0
    %639 = vmatpush1.msra.mxu0 0.0
    %640 = vmatprep.subr.mxu0 0.0
    %641 = vmatpush1.msra.mxu0 0.0
    %642 = vmatprep.subr.mxu0 0.0
    %643 = vmatpush1.msra.mxu0 0.0
    %644 = vmatprep.subr.mxu0 0.0
    %645 = vmatpush1.msra.mxu0 0.0
    %646 = vmatprep.subr.mxu0 0.0
    %647 = vmatpush1.msra.mxu0 0.0
    %648 = vmatprep.subr.mxu0 0.0
    %649 = vmatpush1.msra.mxu0 0.0
    %650 = vmatprep.subr.mxu0 0.0
    %651 = vmatpush1.msra.mxu0 0.0
    %652 = vmatprep.mubr.f32.mxu0 0.0
    %653 = vmatmul.mubr.f32.gmra.mrb[0].mxu0 %v260
    %v654 = vpop.f32.mrb[0].mxu0
    %v655 = vadd.f32 0.0, %v654
    %v656 = vpop.f32.mrb[0].mxu0
    %657 = vmatprep.mubr.f32.mxu0 0.0
    %658 = vmatmul.mubr.f32.gmra.mrb[0].mxu0 %v263
    %v659 = vpop.f32.mrb[0].mxu0
    %v660 = vadd.f32 0.0, %v659
    %v661 = vpop.f32.mrb[0].mxu0
    %662 = vmatprep.mubr.f32.mxu0 0.0
    %663 = vmatmul.mubr.f32.gmra.mrb[0].mxu0 %v266
    %v664 = vpop.f32.mrb[0].mxu0
    %v665 = vadd.f32 0.0, %v664
    %v666 = vpop.f32.mrb[0].mxu0
    %667 = vdwg.mxu0
    %668 = vmatprep.subr.mxu0 0.0
    %669 = vmatpush1.msra.mxu0 %v228
    %670 = vmatprep.subr.mxu0 0.0
    %671 = vmatpush1.msra.mxu0 %v233
    %672 = vmatprep.subr.mxu0 0.0
    %673 = vmatpush1.msra.mxu0 0.0
    %674 = vmatprep.subr.mxu0 0.0
    %675 = vmatpush1.msra.mxu0 0.0
    %676 = vmatprep.subr.mxu0 0.0
    %677 = vmatpush1.msra.mxu0 0.0
    %678 = vmatprep.subr.mxu0 0.0
    %679 = vmatpush1.msra.mxu0 0.0
    %680 = vmatprep.subr.mxu0 0.0
    %681 = vmatpush1.msra.mxu0 0.0
    %682 = vmatprep.subr.mxu0 0.0
    %683 = vmatpush1.msra.mxu0 0.0
    %684 = vmatprep.subr.mxu0 0.0
    %685 = vmatpush1.msra.mxu0 0.0
    %686 = vmatprep.subr.mxu0 0.0
    %687 = vmatpush1.msra.mxu0 0.0
    %688 = vmatprep.subr.mxu0 0.0
    %689 = vmatpush1.msra.mxu0 0.0
    %690 = vmatprep.subr.mxu0 0.0
    %691 = vmatpush1.msra.mxu0 0.0
    %692 = vmatprep.subr.mxu0 0.0
    %693 = vmatpush1.msra.mxu0 0.0
    %694 = vmatprep.subr.mxu0 0.0
    %695 = vmatpush1.msra.mxu0 0.0
    %696 = vmatprep.subr.mxu0 0.0
    %697 = vmatpush1.msra.mxu0 0.0
    %698 = vmatprep.subr.mxu0 0.0
    %699 = vmatpush1.msra.mxu0 0.0
    %700 = vmatprep.subr.mxu0 0.0
    %701 = vmatpush1.msra.mxu0 0.0
    %702 = vmatprep.subr.mxu0 0.0
    %703 = vmatpush1.msra.mxu0 0.0
    %704 = vmatprep.subr.mxu0 0.0
    %705 = vmatpush1.msra.mxu0 0.0
    %706 = vmatprep.subr.mxu0 0.0
    %707 = vmatpush1.msra.mxu0 0.0
    %708 = vmatprep.subr.mxu0 0.0
    %709 = vmatpush1.msra.mxu0 0.0
    %710 = vmatprep.subr.mxu0 0.0
    %711 = vmatpush1.msra.mxu0 0.0
    %712 = vmatprep.subr.mxu0 0.0
    %713 = vmatpush1.msra.mxu0 0.0
    %714 = vmatprep.subr.mxu0 0.0
    %715 = vmatpush1.msra.mxu0 0.0
    %716 = vmatprep.subr.mxu0 0.0
    %717 = vmatpush1.msra.mxu0 0.0
    %718 = vmatprep.subr.mxu0 0.0
    %719 = vmatpush1.msra.mxu0 0.0
    %720 = vmatprep.subr.mxu0 0.0
    %721 = vmatpush1.msra.mxu0 0.0
    %722 = vmatprep.subr.mxu0 0.0
    %723 = vmatpush1.msra.mxu0 0.0
    %724 = vmatprep.subr.mxu0 0.0
    %725 = vmatpush1.msra.mxu0 0.0
    %726 = vmatprep.subr.mxu0 0.0
    %727 = vmatpush1.msra.mxu0 0.0
    %728 = vmatprep.subr.mxu0 0.0
    %729 = vmatpush1.msra.mxu0 0.0
    %730 = vmatprep.subr.mxu0 0.0
    %731 = vmatpush1.msra.mxu0 0.0
    %732 = vmatprep.mubr.f32.mxu0 0.0
    %733 = vmatmul.mubr.f32.gmra.mrb[0].mxu0 %v260
    %v734 = vpop.f32.mrb[0].mxu0
    %v735 = vadd.f32 0.0, %v734
    %v736 = vpop.f32.mrb[0].mxu0
    %737 = vmatprep.mubr.f32.mxu0 0.0
    %738 = vmatmul.mubr.f32.gmra.mrb[0].mxu0 %v263
    %v739 = vpop.f32.mrb[0].mxu0
    %v740 = vadd.f32 0.0, %v739
    %v741 = vpop.f32.mrb[0].mxu0
    %742 = vmatprep.mubr.f32.mxu0 0.0
    %743 = vmatmul.mubr.f32.gmra.mrb[0].mxu0 %v266
    %v744 = vpop.f32.mrb[0].mxu0
    %v745 = vadd.f32 0.0, %v744
    %v746 = vpop.f32.mrb[0].mxu0
    %747 = vdwg.mxu0
    %748 = vmatprep.subr.mxu0 0.0
    %749 = vmatpush1.msra.mxu0 %v238
    %750 = vmatprep.subr.mxu0 0.0
    %751 = vmatpush1.msra.mxu0 %v243
    %752 = vmatprep.subr.mxu0 0.0
    %753 = vmatpush1.msra.mxu0 0.0
    %754 = vmatprep.subr.mxu0 0.0
    %755 = vmatpush1.msra.mxu0 0.0
    %756 = vmatprep.subr.mxu0 0.0
    %757 = vmatpush1.msra.mxu0 0.0
    %758 = vmatprep.subr.mxu0 0.0
    %759 = vmatpush1.msra.mxu0 0.0
    %760 = vmatprep.subr.mxu0 0.0
    %761 = vmatpush1.msra.mxu0 0.0
    %762 = vmatprep.subr.mxu0 0.0
    %763 = vmatpush1.msra.mxu0 0.0
    %764 = vmatprep.subr.mxu0 0.0
    %765 = vmatpush1.msra.mxu0 0.0
    %766 = vmatprep.subr.mxu0 0.0
    %767 = vmatpush1.msra.mxu0 0.0
    %768 = vmatprep.subr.mxu0 0.0
    %769 = vmatpush1.msra.mxu0 0.0
    %770 = vmatprep.subr.mxu0 0.0
    %771 = vmatpush1.msra.mxu0 0.0
    %772 = vmatprep.subr.mxu0 0.0
    %773 = vmatpush1.msra.mxu0 0.0
    %774 = vmatprep.subr.mxu0 0.0
    %775 = vmatpush1.msra.mxu0 0.0
    %776 = vmatprep.subr.mxu0 0.0
    %777 = vmatpush1.msra.mxu0 0.0
    %778 = vmatprep.subr.mxu0 0.0
    %779 = vmatpush1.msra.mxu0 0.0
    %780 = vmatprep.subr.mxu0 0.0
    %781 = vmatpush1.msra.mxu0 0.0
    %782 = vmatprep.subr.mxu0 0.0
    %783 = vmatpush1.msra.mxu0 0.0
    %784 = vmatprep.subr.mxu0 0.0
    %785 = vmatpush1.msra.mxu0 0.0
    %786 = vmatprep.subr.mxu0 0.0
    %787 = vmatpush1.msra.mxu0 0.0
    %788 = vmatprep.subr.mxu0 0.0
    %789 = vmatpush1.msra.mxu0 0.0
    %790 = vmatprep.subr.mxu0 0.0
    %791 = vmatpush1.msra.mxu0 0.0
    %792 = vmatprep.subr.mxu0 0.0
    %793 = vmatpush1.msra.mxu0 0.0
    %794 = vmatprep.subr.mxu0 0.0
    %795 = vmatpush1.msra.mxu0 0.0
    %796 = vmatprep.subr.mxu0 0.0
    %797 = vmatpush1.msra.mxu0 0.0
    %798 = vmatprep.subr.mxu0 0.0
    %799 = vmatpush1.msra.mxu0 0.0
    %800 = vmatprep.subr.mxu0 0.0
    %801 = vmatpush1.msra.mxu0 0.0
    %802 = vmatprep.subr.mxu0 0.0
    %803 = vmatpush1.msra.mxu0 0.0
    %804 = vmatprep.subr.mxu0 0.0
    %805 = vmatpush1.msra.mxu0 0.0
    %806 = vmatprep.subr.mxu0 0.0
    %807 = vmatpush1.msra.mxu0 0.0
    %808 = vmatprep.subr.mxu0 0.0
    %809 = vmatpush1.msra.mxu0 0.0
    %810 = vmatprep.subr.mxu0 0.0
    %811 = vmatpush1.msra.mxu0 0.0
    %812 = vmatprep.mubr.f32.mxu0 0.0
    %813 = vmatmul.mubr.f32.gmra.mrb[0].mxu0 %v260
    %v814 = vpop.f32.mrb[0].mxu0
    %v815 = vadd.f32 0.0, %v814
    %v816 = vpop.f32.mrb[0].mxu0
    %817 = vmatprep.mubr.f32.mxu0 0.0
    %818 = vmatmul.mubr.f32.gmra.mrb[0].mxu0 %v263
    %v819 = vpop.f32.mrb[0].mxu0
    %v820 = vadd.f32 0.0, %v819
    %v821 = vpop.f32.mrb[0].mxu0
    %822 = vmatprep.mubr.f32.mxu0 0.0
    %823 = vmatmul.mubr.f32.gmra.mrb[0].mxu0 %v266
    %v824 = vpop.f32.mrb[0].mxu0
    %v825 = vadd.f32 0.0, %v824
    %v826 = vpop.f32.mrb[0].mxu0
    %827 = vdwg.mxu0
    %828 = vmatprep.subr.mxu0 0.0
    %829 = vmatpush1.msra.mxu0 %v248
    %830 = vmatprep.subr.mxu0 0.0
    %831 = vmatpush1.msra.mxu0 %v253
    %832 = vmatprep.subr.mxu0 0.0
    %833 = vmatpush1.msra.mxu0 0.0
    %834 = vmatprep.subr.mxu0 0.0
    %835 = vmatpush1.msra.mxu0 0.0
    %836 = vmatprep.subr.mxu0 0.0
    %837 = vmatpush1.msra.mxu0 0.0
    %838 = vmatprep.subr.mxu0 0.0
    %839 = vmatpush1.msra.mxu0 0.0
    %840 = vmatprep.subr.mxu0 0.0
    %841 = vmatpush1.msra.mxu0 0.0
    %842 = vmatprep.subr.mxu0 0.0
    %843 = vmatpush1.msra.mxu0 0.0
    %844 = vmatprep.subr.mxu0 0.0
    %845 = vmatpush1.msra.mxu0 0.0
    %846 = vmatprep.subr.mxu0 0.0
    %847 = vmatpush1.msra.mxu0 0.0
    %848 = vmatprep.subr.mxu0 0.0
    %849 = vmatpush1.msra.mxu0 0.0
    %850 = vmatprep.subr.mxu0 0.0
    %851 = vmatpush1.msra.mxu0 0.0
    %852 = vmatprep.subr.mxu0 0.0
    %853 = vmatpush1.msra.mxu0 0.0
    %854 = vmatprep.subr.mxu0 0.0
    %855 = vmatpush1.msra.mxu0 0.0
    %856 = vmatprep.subr.mxu0 0.0
    %857 = vmatpush1.msra.mxu0 0.0
    %858 = vmatprep.subr.mxu0 0.0
    %859 = vmatpush1.msra.mxu0 0.0
    %860 = vmatprep.subr.mxu0 0.0
    %861 = vmatpush1.msra.mxu0 0.0
    %862 = vmatprep.subr.mxu0 0.0
    %863 = vmatpush1.msra.mxu0 0.0
    %864 = vmatprep.subr.mxu0 0.0
    %865 = vmatpush1.msra.mxu0 0.0
    %866 = vmatprep.subr.mxu0 0.0
    %867 = vmatpush1.msra.mxu0 0.0
    %868 = vmatprep.subr.mxu0 0.0
    %869 = vmatpush1.msra.mxu0 0.0
    %870 = vmatprep.subr.mxu0 0.0
    %871 = vmatpush1.msra.mxu0 0.0
    %872 = vmatprep.subr.mxu0 0.0
    %873 = vmatpush1.msra.mxu0 0.0
    %874 = vmatprep.subr.mxu0 0.0
    %875 = vmatpush1.msra.mxu0 0.0
    %876 = vmatprep.subr.mxu0 0.0
    %877 = vmatpush1.msra.mxu0 0.0
    %878 = vmatprep.subr.mxu0 0.0
    %879 = vmatpush1.msra.mxu0 0.0
    %880 = vmatprep.subr.mxu0 0.0
    %881 = vmatpush1.msra.mxu0 0.0
    %882 = vmatprep.subr.mxu0 0.0
    %883 = vmatpush1.msra.mxu0 0.0
    %884 = vmatprep.subr.mxu0 0.0
    %885 = vmatpush1.msra.mxu0 0.0
    %886 = vmatprep.subr.mxu0 0.0
    %887 = vmatpush1.msra.mxu0 0.0
    %888 = vmatprep.subr.mxu0 0.0
    %889 = vmatpush1.msra.mxu0 0.0
    %890 = vmatprep.subr.mxu0 0.0
    %891 = vmatpush1.msra.mxu0 0.0
    %892 = vmatprep.mubr.f32.mxu0 0.0
    %893 = vmatmul.mubr.f32.gmra.mrb[0].mxu0 %v260
    %v894 = vpop.f32.mrb[0].mxu0
    %v895 = vadd.f32 0.0, %v894
    %v896 = vpop.f32.mrb[0].mxu0
    %897 = vmatprep.mubr.f32.mxu0 0.0
    %898 = vmatmul.mubr.f32.gmra.mrb[0].mxu0 %v263
    %v899 = vpop.f32.mrb[0].mxu0
    %v900 = vadd.f32 0.0, %v899
    %v901 = vpop.f32.mrb[0].mxu0
    %902 = vmatprep.mubr.f32.mxu0 0.0
    %903 = vmatmul.mubr.f32.gmra.mrb[0].mxu0 %v266
    %v904 = vpop.f32.mrb[0].mxu0
    %v905 = vadd.f32 0.0, %v904
    %v906 = vpop.f32.mrb[0].mxu0
    %907 = vdwg.mxu0
    %912 = vrot.lane.b32.xlu0 %v335, 120
    %v913 = vpop.permute.xlu0 %912
    %914 = vrot.lane.b32.xlu0 %v415, 120
    %v915 = vpop.permute.xlu0 %914
    %916 = vrot.lane.b32.xlu0 %v655, 120
    %v917 = vpop.permute.xlu0 %916
    %918 = vrot.lane.b32.xlu0 %v735, 120
    %v919 = vpop.permute.xlu0 %918
    %924 = vrot.lane.b32.xlu0 %v335, 112
    %v925 = vpop.permute.xlu0 %924
    %926 = vrot.lane.b32.xlu0 %v415, 112
    %v927 = vpop.permute.xlu0 %926
    %928 = vrot.lane.b32.xlu0 %v655, 112
    %v929 = vpop.permute.xlu0 %928
    %930 = vrot.lane.b32.xlu0 %v735, 112
    %v931 = vpop.permute.xlu0 %930
    %940 = vrot.lane.b32.xlu0 %v340, 120
    %v941 = vpop.permute.xlu0 %940
    %942 = vrot.lane.b32.xlu0 %v420, 120
    %v943 = vpop.permute.xlu0 %942
    %944 = vrot.lane.b32.xlu0 %v660, 120
    %v945 = vpop.permute.xlu0 %944
    %946 = vrot.lane.b32.xlu0 %v740, 120
    %v947 = vpop.permute.xlu0 %946
    %952 = vrot.lane.b32.xlu0 %v340, 112
    %v953 = vpop.permute.xlu0 %952
    %954 = vrot.lane.b32.xlu0 %v420, 112
    %v955 = vpop.permute.xlu0 %954
    %956 = vrot.lane.b32.xlu0 %v660, 112
    %v957 = vpop.permute.xlu0 %956
    %958 = vrot.lane.b32.xlu0 %v740, 112
    %v959 = vpop.permute.xlu0 %958
    %968 = vrot.lane.b32.xlu0 %v345, 120
    %v969 = vpop.permute.xlu0 %968
    %970 = vrot.lane.b32.xlu0 %v425, 120
    %v971 = vpop.permute.xlu0 %970
    %972 = vrot.lane.b32.xlu0 %v665, 120
    %v973 = vpop.permute.xlu0 %972
    %974 = vrot.lane.b32.xlu0 %v745, 120
    %v975 = vpop.permute.xlu0 %974
    %980 = vrot.lane.b32.xlu0 %v345, 112
    %v981 = vpop.permute.xlu0 %980
    %982 = vrot.lane.b32.xlu0 %v425, 112
    %v983 = vpop.permute.xlu0 %982
    %984 = vrot.lane.b32.xlu0 %v665, 112
    %v985 = vpop.permute.xlu0 %984
    %986 = vrot.lane.b32.xlu0 %v745, 112
    %v987 = vpop.permute.xlu0 %986
    %v992 = vcombine.low %v335, %v913
    %v993 = vcombine.high %v335, %v913
    %v995 = vunpack.c.l.s4 1983009808
    %v996 = vunpack.c.0.s8 %v995
    %v997 = vlaneseq
    %v998 = vshrl.u32 %v997, 7
    %v999 = vsub.s32 %v996, %v998
    %v1000 = vrot.slane %v992, %v999
    %v1002 = vunpack.c.l.s4 1983009808
    %v1003 = vunpack.c.0.s8 %v1002
    %v1004 = vlaneseq
    %v1005 = vshrl.u32 %v1004, 7
    %v1006 = vsub.s32 %v1003, %v1005
    %v1007 = vrot.slane %v993, %v1006
    %v1008 = vcombine.low %v415, %v915
    %v1009 = vcombine.high %v415, %v915
    %v1011 = vunpack.c.l.s4 1983009808
    %v1012 = vunpack.c.0.s8 %v1011
    %v1013 = vlaneseq
    %v1014 = vshrl.u32 %v1013, 7
    %v1015 = vsub.s32 %v1012, %v1014
    %v1016 = vrot.slane %v1008, %v1015
    %v1018 = vunpack.c.l.s4 1983009808
    %v1019 = vunpack.c.0.s8 %v1018
    %v1020 = vlaneseq
    %v1021 = vshrl.u32 %v1020, 7
    %v1022 = vsub.s32 %v1019, %v1021
    %v1023 = vrot.slane %v1009, %v1022
    %v1024 = vcombine.low %v925, %v340
    %v1025 = vcombine.high %v925, %v340
    %v1027 = vunpack.c.l.s4 1983009808
    %v1028 = vunpack.c.0.s8 %v1027
    %v1029 = vlaneseq
    %v1030 = vshrl.u32 %v1029, 7
    %v1031 = vsub.s32 %v1028, %v1030
    %v1032 = vrot.slane %v1024, %v1031
    %v1034 = vunpack.c.l.s4 1983009808
    %v1035 = vunpack.c.0.s8 %v1034
    %v1036 = vlaneseq
    %v1037 = vshrl.u32 %v1036, 7
    %v1038 = vsub.s32 %v1035, %v1037
    %v1039 = vrot.slane %v1025, %v1038
    %v1040 = vcombine.low %v927, %v420
    %v1041 = vcombine.high %v927, %v420
    %v1043 = vunpack.c.l.s4 1983009808
    %v1044 = vunpack.c.0.s8 %v1043
    %v1045 = vlaneseq
    %v1046 = vshrl.u32 %v1045, 7
    %v1047 = vsub.s32 %v1044, %v1046
    %v1048 = vrot.slane %v1040, %v1047
    %v1050 = vunpack.c.l.s4 1983009808
    %v1051 = vunpack.c.0.s8 %v1050
    %v1052 = vlaneseq
    %v1053 = vshrl.u32 %v1052, 7
    %v1054 = vsub.s32 %v1051, %v1053
    %v1055 = vrot.slane %v1041, %v1054
    %v1056 = vcombine.low %v1000, %v1016
    %v1057 = vcombine.high %v1000, %v1016
    %v1059 = vunpack.c.l.s4 1934713408
    %v1060 = vunpack.c.0.s8 %v1059
    %v1061 = vlaneseq
    %v1062 = vshrl.u32 %v1061, 7
    %v1063 = vsub.s32 %v1060, %v1062
    %v1064 = vrot.slane %v1056, %v1063
    %v1066 = vunpack.c.l.s4 1934713408
    %v1067 = vunpack.c.0.s8 %v1066
    %v1068 = vlaneseq
    %v1069 = vshrl.u32 %v1068, 7
    %v1070 = vsub.s32 %v1067, %v1069
    %v1071 = vrot.slane %v1057, %v1070
    %v1072 = vcombine.low %v1007, %v1023
    %v1073 = vcombine.high %v1007, %v1023
    %v1075 = vunpack.c.l.s4 1934713408
    %v1076 = vunpack.c.0.s8 %v1075
    %v1077 = vlaneseq
    %v1078 = vshrl.u32 %v1077, 7
    %v1079 = vsub.s32 %v1076, %v1078
    %v1080 = vrot.slane %v1072, %v1079
    %v1082 = vunpack.c.l.s4 1934713408
    %v1083 = vunpack.c.0.s8 %v1082
    %v1084 = vlaneseq
    %v1085 = vshrl.u32 %v1084, 7
    %v1086 = vsub.s32 %v1083, %v1085
    %v1087 = vrot.slane %v1073, %v1086
    %v1088 = vcombine.low %v1032, %v1048
    %v1089 = vcombine.high %v1032, %v1048
    %v1091 = vunpack.c.l.s4 1934713408
    %v1092 = vunpack.c.0.s8 %v1091
    %v1093 = vlaneseq
    %v1094 = vshrl.u32 %v1093, 7
    %v1095 = vsub.s32 %v1092, %v1094
    %v1096 = vrot.slane %v1088, %v1095
    %v1098 = vunpack.c.l.s4 1934713408
    %v1099 = vunpack.c.0.s8 %v1098
    %v1100 = vlaneseq
    %v1101 = vshrl.u32 %v1100, 7
    %v1102 = vsub.s32 %v1099, %v1101
    %v1103 = vrot.slane %v1089, %v1102
    %v1104 = vcombine.low %v1039, %v1055
    %v1105 = vcombine.high %v1039, %v1055
    %v1107 = vunpack.c.l.s4 1934713408
    %v1108 = vunpack.c.0.s8 %v1107
    %v1109 = vlaneseq
    %v1110 = vshrl.u32 %v1109, 7
    %v1111 = vsub.s32 %v1108, %v1110
    %v1112 = vrot.slane %v1104, %v1111
    %v1114 = vunpack.c.l.s4 1934713408
    %v1115 = vunpack.c.0.s8 %v1114
    %v1116 = vlaneseq
    %v1117 = vshrl.u32 %v1116, 7
    %v1118 = vsub.s32 %v1115, %v1117
    %v1119 = vrot.slane %v1105, %v1118
    %v1120 = vcombine.low %v1064, %v1096
    %v1121 = vcombine.high %v1064, %v1096
    %v1122 = vcombine.low %v1071, %v1103
    %v1123 = vcombine.high %v1071, %v1103
    %v1124 = vcombine.low %v1080, %v1112
    %v1125 = vcombine.high %v1080, %v1112
    %v1126 = vcombine.low %v1087, %v1119
    %v1127 = vcombine.high %v1087, %v1119
    %v1128 = vcombine.low %v941, %v953
    %v1129 = vcombine.high %v941, %v953
    %v1131 = vunpack.c.l.s4 1983009808
    %v1132 = vunpack.c.0.s8 %v1131
    %v1133 = vlaneseq
    %v1134 = vshrl.u32 %v1133, 7
    %v1135 = vsub.s32 %v1132, %v1134
    %v1136 = vrot.slane %v1128, %v1135
    %v1138 = vunpack.c.l.s4 1983009808
    %v1139 = vunpack.c.0.s8 %v1138
    %v1140 = vlaneseq
    %v1141 = vshrl.u32 %v1140, 7
    %v1142 = vsub.s32 %v1139, %v1141
    %v1143 = vrot.slane %v1129, %v1142
    %v1144 = vcombine.low %v943, %v955
    %v1145 = vcombine.high %v943, %v955
    %v1147 = vunpack.c.l.s4 1983009808
    %v1148 = vunpack.c.0.s8 %v1147
    %v1149 = vlaneseq
    %v1150 = vshrl.u32 %v1149, 7
    %v1151 = vsub.s32 %v1148, %v1150
    %v1152 = vrot.slane %v1144, %v1151
    %v1154 = vunpack.c.l.s4 1983009808
    %v1155 = vunpack.c.0.s8 %v1154
    %v1156 = vlaneseq
    %v1157 = vshrl.u32 %v1156, 7
    %v1158 = vsub.s32 %v1155, %v1157
    %v1159 = vrot.slane %v1145, %v1158
    %v1160 = vcombine.low %v345, %v969
    %v1161 = vcombine.high %v345, %v969
    %v1163 = vunpack.c.l.s4 1983009808
    %v1164 = vunpack.c.0.s8 %v1163
    %v1165 = vlaneseq
    %v1166 = vshrl.u32 %v1165, 7
    %v1167 = vsub.s32 %v1164, %v1166
    %v1168 = vrot.slane %v1160, %v1167
    %v1170 = vunpack.c.l.s4 1983009808
    %v1171 = vunpack.c.0.s8 %v1170
    %v1172 = vlaneseq
    %v1173 = vshrl.u32 %v1172, 7
    %v1174 = vsub.s32 %v1171, %v1173
    %v1175 = vrot.slane %v1161, %v1174
    %v1176 = vcombine.low %v425, %v971
    %v1177 = vcombine.high %v425, %v971
    %v1179 = vunpack.c.l.s4 1983009808
    %v1180 = vunpack.c.0.s8 %v1179
    %v1181 = vlaneseq
    %v1182 = vshrl.u32 %v1181, 7
    %v1183 = vsub.s32 %v1180, %v1182
    %v1184 = vrot.slane %v1176, %v1183
    %v1186 = vunpack.c.l.s4 1983009808
    %v1187 = vunpack.c.0.s8 %v1186
    %v1188 = vlaneseq
    %v1189 = vshrl.u32 %v1188, 7
    %v1190 = vsub.s32 %v1187, %v1189
    %v1191 = vrot.slane %v1177, %v1190
    %v1192 = vcombine.low %v1136, %v1152
    %v1193 = vcombine.high %v1136, %v1152
    %v1195 = vunpack.c.l.s4 1934713408
    %v1196 = vunpack.c.0.s8 %v1195
    %v1197 = vlaneseq
    %v1198 = vshrl.u32 %v1197, 7
    %v1199 = vsub.s32 %v1196, %v1198
    %v1200 = vrot.slane %v1192, %v1199
    %v1202 = vunpack.c.l.s4 1934713408
    %v1203 = vunpack.c.0.s8 %v1202
    %v1204 = vlaneseq
    %v1205 = vshrl.u32 %v1204, 7
    %v1206 = vsub.s32 %v1203, %v1205
    %v1207 = vrot.slane %v1193, %v1206
    %v1208 = vcombine.low %v1143, %v1159
    %v1209 = vcombine.high %v1143, %v1159
    %v1211 = vunpack.c.l.s4 1934713408
    %v1212 = vunpack.c.0.s8 %v1211
    %v1213 = vlaneseq
    %v1214 = vshrl.u32 %v1213, 7
    %v1215 = vsub.s32 %v1212, %v1214
    %v1216 = vrot.slane %v1208, %v1215
    %v1218 = vunpack.c.l.s4 1934713408
    %v1219 = vunpack.c.0.s8 %v1218
    %v1220 = vlaneseq
    %v1221 = vshrl.u32 %v1220, 7
    %v1222 = vsub.s32 %v1219, %v1221
    %v1223 = vrot.slane %v1209, %v1222
    %v1224 = vcombine.low %v1168, %v1184
    %v1225 = vcombine.high %v1168, %v1184
    %v1227 = vunpack.c.l.s4 1934713408
    %v1228 = vunpack.c.0.s8 %v1227
    %v1229 = vlaneseq
    %v1230 = vshrl.u32 %v1229, 7
    %v1231 = vsub.s32 %v1228, %v1230
    %v1232 = vrot.slane %v1224, %v1231
    %v1234 = vunpack.c.l.s4 1934713408
    %v1235 = vunpack.c.0.s8 %v1234
    %v1236 = vlaneseq
    %v1237 = vshrl.u32 %v1236, 7
    %v1238 = vsub.s32 %v1235, %v1237
    %v1239 = vrot.slane %v1225, %v1238
    %v1240 = vcombine.low %v1175, %v1191
    %v1241 = vcombine.high %v1175, %v1191
    %v1243 = vunpack.c.l.s4 1934713408
    %v1244 = vunpack.c.0.s8 %v1243
    %v1245 = vlaneseq
    %v1246 = vshrl.u32 %v1245, 7
    %v1247 = vsub.s32 %v1244, %v1246
    %v1248 = vrot.slane %v1240, %v1247
    %v1250 = vunpack.c.l.s4 1934713408
    %v1251 = vunpack.c.0.s8 %v1250
    %v1252 = vlaneseq
    %v1253 = vshrl.u32 %v1252, 7
    %v1254 = vsub.s32 %v1251, %v1253
    %v1255 = vrot.slane %v1241, %v1254
    %v1256 = vcombine.low %v1200, %v1232
    %v1257 = vcombine.high %v1200, %v1232
    %v1258 = vcombine.low %v1207, %v1239
    %v1259 = vcombine.high %v1207, %v1239
    %v1260 = vcombine.low %v1216, %v1248
    %v1261 = vcombine.high %v1216, %v1248
    %v1262 = vcombine.low %v1223, %v1255
    %v1263 = vcombine.high %v1223, %v1255
    %v1264 = vcombine.high %v981, 0.0
    %v1266 = vunpack.c.l.s4 1983009808
    %v1267 = vunpack.c.0.s8 %v1266
    %v1268 = vlaneseq
    %v1269 = vshrl.u32 %v1268, 7
    %v1270 = vsub.s32 %v1267, %v1269
    %v1271 = vrot.slane %v981, %v1270
    %v1273 = vunpack.c.l.s4 1983009808
    %v1274 = vunpack.c.0.s8 %v1273
    %v1275 = vlaneseq
    %v1276 = vshrl.u32 %v1275, 7
    %v1277 = vsub.s32 %v1274, %v1276
    %v1278 = vrot.slane %v1264, %v1277
    %v1279 = vcombine.high %v983, 0.0
    %v1281 = vunpack.c.l.s4 1983009808
    %v1282 = vunpack.c.0.s8 %v1281
    %v1283 = vlaneseq
    %v1284 = vshrl.u32 %v1283, 7
    %v1285 = vsub.s32 %v1282, %v1284
    %v1286 = vrot.slane %v983, %v1285
    %v1288 = vunpack.c.l.s4 1983009808
    %v1289 = vunpack.c.0.s8 %v1288
    %v1290 = vlaneseq
    %v1291 = vshrl.u32 %v1290, 7
    %v1292 = vsub.s32 %v1289, %v1291
    %v1293 = vrot.slane %v1279, %v1292
    %v1294 = vcombine.low %v1271, %v1286
    %v1295 = vcombine.high %v1271, %v1286
    %v1297 = vunpack.c.l.s4 1934713408
    %v1298 = vunpack.c.0.s8 %v1297
    %v1299 = vlaneseq
    %v1300 = vshrl.u32 %v1299, 7
    %v1301 = vsub.s32 %v1298, %v1300
    %v1302 = vrot.slane %v1294, %v1301
    %v1304 = vunpack.c.l.s4 1934713408
    %v1305 = vunpack.c.0.s8 %v1304
    %v1306 = vlaneseq
    %v1307 = vshrl.u32 %v1306, 7
    %v1308 = vsub.s32 %v1305, %v1307
    %v1309 = vrot.slane %v1295, %v1308
    %v1310 = vcombine.low %v1278, %v1293
    %v1311 = vcombine.high %v1278, %v1293
    %v1313 = vunpack.c.l.s4 1934713408
    %v1314 = vunpack.c.0.s8 %v1313
    %v1315 = vlaneseq
    %v1316 = vshrl.u32 %v1315, 7
    %v1317 = vsub.s32 %v1314, %v1316
    %v1318 = vrot.slane %v1310, %v1317
    %v1320 = vunpack.c.l.s4 1934713408
    %v1321 = vunpack.c.0.s8 %v1320
    %v1322 = vlaneseq
    %v1323 = vshrl.u32 %v1322, 7
    %v1324 = vsub.s32 %v1321, %v1323
    %v1325 = vrot.slane %v1311, %v1324
    %v1326 = vcombine.high %v1302, 0.0
    %v1327 = vcombine.high %v1309, 0.0
    %v1328 = vcombine.high %v1318, 0.0
    %v1329 = vcombine.high %v1325, 0.0
    %v1330 = vcombine.low %v655, %v917
    %v1331 = vcombine.high %v655, %v917
    %v1333 = vunpack.c.l.s4 1983009808
    %v1334 = vunpack.c.0.s8 %v1333
    %v1335 = vlaneseq
    %v1336 = vshrl.u32 %v1335, 7
    %v1337 = vsub.s32 %v1334, %v1336
    %v1338 = vrot.slane %v1330, %v1337
    %v1340 = vunpack.c.l.s4 1983009808
    %v1341 = vunpack.c.0.s8 %v1340
    %v1342 = vlaneseq
    %v1343 = vshrl.u32 %v1342, 7
    %v1344 = vsub.s32 %v1341, %v1343
    %v1345 = vrot.slane %v1331, %v1344
    %v1346 = vcombine.low %v735, %v919
    %v1347 = vcombine.high %v735, %v919
    %v1349 = vunpack.c.l.s4 1983009808
    %v1350 = vunpack.c.0.s8 %v1349
    %v1351 = vlaneseq
    %v1352 = vshrl.u32 %v1351, 7
    %v1353 = vsub.s32 %v1350, %v1352
    %v1354 = vrot.slane %v1346, %v1353
    %v1356 = vunpack.c.l.s4 1983009808
    %v1357 = vunpack.c.0.s8 %v1356
    %v1358 = vlaneseq
    %v1359 = vshrl.u32 %v1358, 7
    %v1360 = vsub.s32 %v1357, %v1359
    %v1361 = vrot.slane %v1347, %v1360
    %v1362 = vcombine.low %v929, %v660
    %v1363 = vcombine.high %v929, %v660
    %v1365 = vunpack.c.l.s4 1983009808
    %v1366 = vunpack.c.0.s8 %v1365
    %v1367 = vlaneseq
    %v1368 = vshrl.u32 %v1367, 7
    %v1369 = vsub.s32 %v1366, %v1368
    %v1370 = vrot.slane %v1362, %v1369
    %v1372 = vunpack.c.l.s4 1983009808
    %v1373 = vunpack.c.0.s8 %v1372
    %v1374 = vlaneseq
    %v1375 = vshrl.u32 %v1374, 7
    %v1376 = vsub.s32 %v1373, %v1375
    %v1377 = vrot.slane %v1363, %v1376
    %v1378 = vcombine.low %v931, %v740
    %v1379 = vcombine.high %v931, %v740
    %v1381 = vunpack.c.l.s4 1983009808
    %v1382 = vunpack.c.0.s8 %v1381
    %v1383 = vlaneseq
    %v1384 = vshrl.u32 %v1383, 7
    %v1385 = vsub.s32 %v1382, %v1384
    %v1386 = vrot.slane %v1378, %v1385
    %v1388 = vunpack.c.l.s4 1983009808
    %v1389 = vunpack.c.0.s8 %v1388
    %v1390 = vlaneseq
    %v1391 = vshrl.u32 %v1390, 7
    %v1392 = vsub.s32 %v1389, %v1391
    %v1393 = vrot.slane %v1379, %v1392
    %v1394 = vcombine.low %v1338, %v1354
    %v1395 = vcombine.high %v1338, %v1354
    %v1397 = vunpack.c.l.s4 1934713408
    %v1398 = vunpack.c.0.s8 %v1397
    %v1399 = vlaneseq
    %v1400 = vshrl.u32 %v1399, 7
    %v1401 = vsub.s32 %v1398, %v1400
    %v1402 = vrot.slane %v1394, %v1401
    %v1404 = vunpack.c.l.s4 1934713408
    %v1405 = vunpack.c.0.s8 %v1404
    %v1406 = vlaneseq
    %v1407 = vshrl.u32 %v1406, 7
    %v1408 = vsub.s32 %v1405, %v1407
    %v1409 = vrot.slane %v1395, %v1408
    %v1410 = vcombine.low %v1345, %v1361
    %v1411 = vcombine.high %v1345, %v1361
    %v1413 = vunpack.c.l.s4 1934713408
    %v1414 = vunpack.c.0.s8 %v1413
    %v1415 = vlaneseq
    %v1416 = vshrl.u32 %v1415, 7
    %v1417 = vsub.s32 %v1414, %v1416
    %v1418 = vrot.slane %v1410, %v1417
    %v1420 = vunpack.c.l.s4 1934713408
    %v1421 = vunpack.c.0.s8 %v1420
    %v1422 = vlaneseq
    %v1423 = vshrl.u32 %v1422, 7
    %v1424 = vsub.s32 %v1421, %v1423
    %v1425 = vrot.slane %v1411, %v1424
    %v1426 = vcombine.low %v1370, %v1386
    %v1427 = vcombine.high %v1370, %v1386
    %v1429 = vunpack.c.l.s4 1934713408
    %v1430 = vunpack.c.0.s8 %v1429
    %v1431 = vlaneseq
    %v1432 = vshrl.u32 %v1431, 7
    %v1433 = vsub.s32 %v1430, %v1432
    %v1434 = vrot.slane %v1426, %v1433
    %v1436 = vunpack.c.l.s4 1934713408
    %v1437 = vunpack.c.0.s8 %v1436
    %v1438 = vlaneseq
    %v1439 = vshrl.u32 %v1438, 7
    %v1440 = vsub.s32 %v1437, %v1439
    %v1441 = vrot.slane %v1427, %v1440
    %v1442 = vcombine.low %v1377, %v1393
    %v1443 = vcombine.high %v1377, %v1393
    %v1445 = vunpack.c.l.s4 1934713408
    %v1446 = vunpack.c.0.s8 %v1445
    %v1447 = vlaneseq
    %v1448 = vshrl.u32 %v1447, 7
    %v1449 = vsub.s32 %v1446, %v1448
    %v1450 = vrot.slane %v1442, %v1449
    %v1452 = vunpack.c.l.s4 1934713408
    %v1453 = vunpack.c.0.s8 %v1452
    %v1454 = vlaneseq
    %v1455 = vshrl.u32 %v1454, 7
    %v1456 = vsub.s32 %v1453, %v1455
    %v1457 = vrot.slane %v1443, %v1456
    %v1458 = vcombine.low %v1402, %v1434
    %v1459 = vcombine.high %v1402, %v1434
    %v1460 = vcombine.low %v1409, %v1441
    %v1461 = vcombine.high %v1409, %v1441
    %v1462 = vcombine.low %v1418, %v1450
    %v1463 = vcombine.high %v1418, %v1450
    %v1464 = vcombine.low %v1425, %v1457
    %v1465 = vcombine.high %v1425, %v1457
    %v1466 = vcombine.low %v945, %v957
    %v1467 = vcombine.high %v945, %v957
    %v1469 = vunpack.c.l.s4 1983009808
    %v1470 = vunpack.c.0.s8 %v1469
    %v1471 = vlaneseq
    %v1472 = vshrl.u32 %v1471, 7
    %v1473 = vsub.s32 %v1470, %v1472
    %v1474 = vrot.slane %v1466, %v1473
    %v1476 = vunpack.c.l.s4 1983009808
    %v1477 = vunpack.c.0.s8 %v1476
    %v1478 = vlaneseq
    %v1479 = vshrl.u32 %v1478, 7
    %v1480 = vsub.s32 %v1477, %v1479
    %v1481 = vrot.slane %v1467, %v1480
    %v1482 = vcombine.low %v947, %v959
    %v1483 = vcombine.high %v947, %v959
    %v1485 = vunpack.c.l.s4 1983009808
    %v1486 = vunpack.c.0.s8 %v1485
    %v1487 = vlaneseq
    %v1488 = vshrl.u32 %v1487, 7
    %v1489 = vsub.s32 %v1486, %v1488
    %v1490 = vrot.slane %v1482, %v1489
    %v1492 = vunpack.c.l.s4 1983009808
    %v1493 = vunpack.c.0.s8 %v1492
    %v1494 = vlaneseq
    %v1495 = vshrl.u32 %v1494, 7
    %v1496 = vsub.s32 %v1493, %v1495
    %v1497 = vrot.slane %v1483, %v1496
    %v1498 = vcombine.low %v665, %v973
    %v1499 = vcombine.high %v665, %v973
    %v1501 = vunpack.c.l.s4 1983009808
    %v1502 = vunpack.c.0.s8 %v1501
    %v1503 = vlaneseq
    %v1504 = vshrl.u32 %v1503, 7
    %v1505 = vsub.s32 %v1502, %v1504
    %v1506 = vrot.slane %v1498, %v1505
    %v1508 = vunpack.c.l.s4 1983009808
    %v1509 = vunpack.c.0.s8 %v1508
    %v1510 = vlaneseq
    %v1511 = vshrl.u32 %v1510, 7
    %v1512 = vsub.s32 %v1509, %v1511
    %v1513 = vrot.slane %v1499, %v1512
    %v1514 = vcombine.low %v745, %v975
    %v1515 = vcombine.high %v745, %v975
    %v1517 = vunpack.c.l.s4 1983009808
    %v1518 = vunpack.c.0.s8 %v1517
    %v1519 = vlaneseq
    %v1520 = vshrl.u32 %v1519, 7
    %v1521 = vsub.s32 %v1518, %v1520
    %v1522 = vrot.slane %v1514, %v1521
    %v1524 = vunpack.c.l.s4 1983009808
    %v1525 = vunpack.c.0.s8 %v1524
    %v1526 = vlaneseq
    %v1527 = vshrl.u32 %v1526, 7
    %v1528 = vsub.s32 %v1525, %v1527
    %v1529 = vrot.slane %v1515, %v1528
    %v1530 = vcombine.low %v1474, %v1490
    %v1531 = vcombine.high %v1474, %v1490
    %v1533 = vunpack.c.l.s4 1934713408
    %v1534 = vunpack.c.0.s8 %v1533
    %v1535 = vlaneseq
    %v1536 = vshrl.u32 %v1535, 7
    %v1537 = vsub.s32 %v1534, %v1536
    %v1538 = vrot.slane %v1530, %v1537
    %v1540 = vunpack.c.l.s4 1934713408
    %v1541 = vunpack.c.0.s8 %v1540
    %v1542 = vlaneseq
    %v1543 = vshrl.u32 %v1542, 7
    %v1544 = vsub.s32 %v1541, %v1543
    %v1545 = vrot.slane %v1531, %v1544
    %v1546 = vcombine.low %v1481, %v1497
    %v1547 = vcombine.high %v1481, %v1497
    %v1549 = vunpack.c.l.s4 1934713408
    %v1550 = vunpack.c.0.s8 %v1549
    %v1551 = vlaneseq
    %v1552 = vshrl.u32 %v1551, 7
    %v1553 = vsub.s32 %v1550, %v1552
    %v1554 = vrot.slane %v1546, %v1553
    %v1556 = vunpack.c.l.s4 1934713408
    %v1557 = vunpack.c.0.s8 %v1556
    %v1558 = vlaneseq
    %v1559 = vshrl.u32 %v1558, 7
    %v1560 = vsub.s32 %v1557, %v1559
    %v1561 = vrot.slane %v1547, %v1560
    %v1562 = vcombine.low %v1506, %v1522
    %v1563 = vcombine.high %v1506, %v1522
    %v1565 = vunpack.c.l.s4 1934713408
    %v1566 = vunpack.c.0.s8 %v1565
    %v1567 = vlaneseq
    %v1568 = vshrl.u32 %v1567, 7
    %v1569 = vsub.s32 %v1566, %v1568
    %v1570 = vrot.slane %v1562, %v1569
    %v1572 = vunpack.c.l.s4 1934713408
    %v1573 = vunpack.c.0.s8 %v1572
    %v1574 = vlaneseq
    %v1575 = vshrl.u32 %v1574, 7
    %v1576 = vsub.s32 %v1573, %v1575
    %v1577 = vrot.slane %v1563, %v1576
    %v1578 = vcombine.low %v1513, %v1529
    %v1579 = vcombine.high %v1513, %v1529
    %v1581 = vunpack.c.l.s4 1934713408
    %v1582 = vunpack.c.0.s8 %v1581
    %v1583 = vlaneseq
    %v1584 = vshrl.u32 %v1583, 7
    %v1585 = vsub.s32 %v1582, %v1584
    %v1586 = vrot.slane %v1578, %v1585
    %v1588 = vunpack.c.l.s4 1934713408
    %v1589 = vunpack.c.0.s8 %v1588
    %v1590 = vlaneseq
    %v1591 = vshrl.u32 %v1590, 7
    %v1592 = vsub.s32 %v1589, %v1591
    %v1593 = vrot.slane %v1579, %v1592
    %v1594 = vcombine.low %v1538, %v1570
    %v1595 = vcombine.high %v1538, %v1570
    %v1596 = vcombine.low %v1545, %v1577
    %v1597 = vcombine.high %v1545, %v1577
    %v1598 = vcombine.low %v1554, %v1586
    %v1599 = vcombine.high %v1554, %v1586
    %v1600 = vcombine.low %v1561, %v1593
    %v1601 = vcombine.high %v1561, %v1593
    %v1602 = vcombine.high %v985, 0.0
    %v1604 = vunpack.c.l.s4 1983009808
    %v1605 = vunpack.c.0.s8 %v1604
    %v1606 = vlaneseq
    %v1607 = vshrl.u32 %v1606, 7
    %v1608 = vsub.s32 %v1605, %v1607
    %v1609 = vrot.slane %v985, %v1608
    %v1611 = vunpack.c.l.s4 1983009808
    %v1612 = vunpack.c.0.s8 %v1611
    %v1613 = vlaneseq
    %v1614 = vshrl.u32 %v1613, 7
    %v1615 = vsub.s32 %v1612, %v1614
    %v1616 = vrot.slane %v1602, %v1615
    %v1617 = vcombine.high %v987, 0.0
    %v1619 = vunpack.c.l.s4 1983009808
    %v1620 = vunpack.c.0.s8 %v1619
    %v1621 = vlaneseq
    %v1622 = vshrl.u32 %v1621, 7
    %v1623 = vsub.s32 %v1620, %v1622
    %v1624 = vrot.slane %v987, %v1623
    %v1626 = vunpack.c.l.s4 1983009808
    %v1627 = vunpack.c.0.s8 %v1626
    %v1628 = vlaneseq
    %v1629 = vshrl.u32 %v1628, 7
    %v1630 = vsub.s32 %v1627, %v1629
    %v1631 = vrot.slane %v1617, %v1630
    %v1632 = vcombine.low %v1609, %v1624
    %v1633 = vcombine.high %v1609, %v1624
    %v1635 = vunpack.c.l.s4 1934713408
    %v1636 = vunpack.c.0.s8 %v1635
    %v1637 = vlaneseq
    %v1638 = vshrl.u32 %v1637, 7
    %v1639 = vsub.s32 %v1636, %v1638
    %v1640 = vrot.slane %v1632, %v1639
    %v1642 = vunpack.c.l.s4 1934713408
    %v1643 = vunpack.c.0.s8 %v1642
    %v1644 = vlaneseq
    %v1645 = vshrl.u32 %v1644, 7
    %v1646 = vsub.s32 %v1643, %v1645
    %v1647 = vrot.slane %v1633, %v1646
    %v1648 = vcombine.low %v1616, %v1631
    %v1649 = vcombine.high %v1616, %v1631
    %v1651 = vunpack.c.l.s4 1934713408
    %v1652 = vunpack.c.0.s8 %v1651
    %v1653 = vlaneseq
    %v1654 = vshrl.u32 %v1653, 7
    %v1655 = vsub.s32 %v1652, %v1654
    %v1656 = vrot.slane %v1648, %v1655
    %v1658 = vunpack.c.l.s4 1934713408
    %v1659 = vunpack.c.0.s8 %v1658
    %v1660 = vlaneseq
    %v1661 = vshrl.u32 %v1660, 7
    %v1662 = vsub.s32 %v1659, %v1661
    %v1663 = vrot.slane %v1649, %v1662
    %v1664 = vcombine.high %v1640, 0.0
    %v1665 = vcombine.high %v1647, 0.0
    %v1666 = vcombine.high %v1656, 0.0
    %v1667 = vcombine.high %v1663, 0.0
    %1674 = vrot.lane.b32.xlu0 %v1121, 8
    %v1675 = vpop.permute.xlu0 %1674
    %1676 = vrot.lane.b32.xlu0 %v1257, 8
    %v1677 = vpop.permute.xlu0 %1676
    %1678 = vrot.lane.b32.xlu0 %v1326, 8
    %v1679 = vpop.permute.xlu0 %1678
    %1680 = vrot.lane.b32.xlu0 %v1459, 8
    %v1681 = vpop.permute.xlu0 %1680
    %1682 = vrot.lane.b32.xlu0 %v1595, 8
    %v1683 = vpop.permute.xlu0 %1682
    %1684 = vrot.lane.b32.xlu0 %v1664, 8
    %v1685 = vpop.permute.xlu0 %1684
    %1698 = vrot.lane.b32.xlu0 %v1122, 16
    %v1699 = vpop.permute.xlu0 %1698
    %1700 = vrot.lane.b32.xlu0 %v1258, 16
    %v1701 = vpop.permute.xlu0 %1700
    %1702 = vrot.lane.b32.xlu0 %v1309, 16
    %v1703 = vpop.permute.xlu0 %1702
    %1704 = vrot.lane.b32.xlu0 %v1460, 16
    %v1705 = vpop.permute.xlu0 %1704
    %1706 = vrot.lane.b32.xlu0 %v1596, 16
    %v1707 = vpop.permute.xlu0 %1706
    %1708 = vrot.lane.b32.xlu0 %v1647, 16
    %v1709 = vpop.permute.xlu0 %1708
    %1722 = vrot.lane.b32.xlu0 %v1123, 24
    %v1723 = vpop.permute.xlu0 %1722
    %1724 = vrot.lane.b32.xlu0 %v1259, 24
    %v1725 = vpop.permute.xlu0 %1724
    %1726 = vrot.lane.b32.xlu0 %v1327, 24
    %v1727 = vpop.permute.xlu0 %1726
    %1728 = vrot.lane.b32.xlu0 %v1461, 24
    %v1729 = vpop.permute.xlu0 %1728
    %1730 = vrot.lane.b32.xlu0 %v1597, 24
    %v1731 = vpop.permute.xlu0 %1730
    %1732 = vrot.lane.b32.xlu0 %v1665, 24
    %v1733 = vpop.permute.xlu0 %1732
    %1746 = vrot.lane.b32.xlu0 %v1124, 32
    %v1747 = vpop.permute.xlu0 %1746
    %1748 = vrot.lane.b32.xlu0 %v1260, 32
    %v1749 = vpop.permute.xlu0 %1748
    %1750 = vrot.lane.b32.xlu0 %v1318, 32
    %v1751 = vpop.permute.xlu0 %1750
    %1752 = vrot.lane.b32.xlu0 %v1462, 32
    %v1753 = vpop.permute.xlu0 %1752
    %1754 = vrot.lane.b32.xlu0 %v1598, 32
    %v1755 = vpop.permute.xlu0 %1754
    %1756 = vrot.lane.b32.xlu0 %v1656, 32
    %v1757 = vpop.permute.xlu0 %1756
    %1770 = vrot.lane.b32.xlu0 %v1125, 40
    %v1771 = vpop.permute.xlu0 %1770
    %1772 = vrot.lane.b32.xlu0 %v1261, 40
    %v1773 = vpop.permute.xlu0 %1772
    %1774 = vrot.lane.b32.xlu0 %v1328, 40
    %v1775 = vpop.permute.xlu0 %1774
    %1776 = vrot.lane.b32.xlu0 %v1463, 40
    %v1777 = vpop.permute.xlu0 %1776
    %1778 = vrot.lane.b32.xlu0 %v1599, 40
    %v1779 = vpop.permute.xlu0 %1778
    %1780 = vrot.lane.b32.xlu0 %v1666, 40
    %v1781 = vpop.permute.xlu0 %1780
    %1794 = vrot.lane.b32.xlu0 %v1126, 48
    %v1795 = vpop.permute.xlu0 %1794
    %1796 = vrot.lane.b32.xlu0 %v1262, 48
    %v1797 = vpop.permute.xlu0 %1796
    %1798 = vrot.lane.b32.xlu0 %v1325, 48
    %v1799 = vpop.permute.xlu0 %1798
    %1800 = vrot.lane.b32.xlu0 %v1464, 48
    %v1801 = vpop.permute.xlu0 %1800
    %1802 = vrot.lane.b32.xlu0 %v1600, 48
    %v1803 = vpop.permute.xlu0 %1802
    %1804 = vrot.lane.b32.xlu0 %v1663, 48
    %v1805 = vpop.permute.xlu0 %1804
    %1818 = vrot.lane.b32.xlu0 %v1127, 56
    %v1819 = vpop.permute.xlu0 %1818
    %1820 = vrot.lane.b32.xlu0 %v1263, 56
    %v1821 = vpop.permute.xlu0 %1820
    %1822 = vrot.lane.b32.xlu0 %v1329, 56
    %v1823 = vpop.permute.xlu0 %1822
    %1824 = vrot.lane.b32.xlu0 %v1465, 56
    %v1825 = vpop.permute.xlu0 %1824
    %1826 = vrot.lane.b32.xlu0 %v1601, 56
    %v1827 = vpop.permute.xlu0 %1826
    %1828 = vrot.lane.b32.xlu0 %v1667, 56
    %v1829 = vpop.permute.xlu0 %1828
    %vm1836 = vcmask 64512
    %v1837 = vsel %vm1836, %v1120, %v1675
    %v1838 = vsel %vm1836, %v1256, %v1677
    %v1839 = vsel %vm1836, %v1302, %v1679
    %v1840 = vsel %vm1836, %v1458, %v1681
    %v1841 = vsel %vm1836, %v1594, %v1683
    %v1842 = vsel %vm1836, %v1640, %v1685
    %v1843 = vsel %vm62, %v1837, %v1699
    %v1844 = vsel %vm62, %v1838, %v1701
    %v1845 = vsel %vm62, %v1839, %v1703
    %v1846 = vsel %vm62, %v1840, %v1705
    %v1847 = vsel %vm62, %v1841, %v1707
    %v1848 = vsel %vm62, %v1842, %v1709
    %vm1849 = vcmask 195584
    %v1850 = vsel %vm1849, %v1843, %v1723
    %v1851 = vsel %vm1849, %v1844, %v1725
    %v1852 = vsel %vm1849, %v1845, %v1727
    %v1853 = vsel %vm1849, %v1846, %v1729
    %v1854 = vsel %vm1849, %v1847, %v1731
    %v1855 = vsel %vm1849, %v1848, %v1733
    %vm1856 = vcmask 261120
    %v1857 = vsel %vm1856, %v1850, %v1747
    %v1858 = vsel %vm1856, %v1851, %v1749
    %v1859 = vsel %vm1856, %v1852, %v1751
    %v1860 = vsel %vm1856, %v1853, %v1753
    %v1861 = vsel %vm1856, %v1854, %v1755
    %v1862 = vsel %vm1856, %v1855, %v1757
    %vm1863 = vcmask 326656
    %v1864 = vsel %vm1863, %v1857, %v1771
    %v1865 = vsel %vm1863, %v1858, %v1773
    %v1866 = vsel %vm1863, %v1859, %v1775
    %v1867 = vsel %vm1863, %v1860, %v1777
    %v1868 = vsel %vm1863, %v1861, %v1779
    %v1869 = vsel %vm1863, %v1862, %v1781
    %vm1870 = vcmask 392192
    %v1871 = vsel %vm1870, %v1864, %v1795
    %v1872 = vsel %vm1870, %v1865, %v1797
    %v1873 = vsel %vm1870, %v1866, %v1799
    %v1874 = vsel %vm1870, %v1867, %v1801
    %v1875 = vsel %vm1870, %v1868, %v1803
    %v1876 = vsel %vm1870, %v1869, %v1805
    %vm1877 = vcmask 457728
    %v1878 = vsel %vm1877, %v1871, %v1819
    %v1879 = vsel %vm1877, %v1872, %v1821
    %v1880 = vsel %vm1877, %v1873, %v1823
    %v1881 = vsel %vm1877, %v1874, %v1825
    %v1882 = vsel %vm1877, %v1875, %v1827
    %v1883 = vsel %vm1877, %v1876, %v1829
    %v1884 = vld [vmem:[%s4] sm:$0x3]
    %v1885 = vld [vmem:[%s5] sm:$0x3]
    %1887 = vset.pattern.permute.xlu0 0
    %1888 = vperm.xlu0 %1887, %v1885
    %v1889 = vpop.permute.xlu0 %1888
    %vm1891 = vcmask 146432
    %v1893 = vsel %vm1891, %v1884, 0
    %vm1895 = vcmask 1041408
    %v1897 = vsel %vm1895, %v1880, 0
    %1899 = vmatprep.subr.mxu0 0.0
    %1900 = vmatpush1.msra.mxu0 %v1878
    %1901 = vmatprep.subr.mxu0 0.0
    %1902 = vmatpush1.msra.mxu0 %v1879
    %1903 = vmatprep.subr.mxu0 0.0
    %1904 = vmatpush1.msra.mxu0 %v1897
    %1905 = vmatprep.subr.mxu0 0.0
    %1906 = vmatpush1.msra.mxu0 0.0
    %1907 = vmatprep.subr.mxu0 0.0
    %1908 = vmatpush1.msra.mxu0 0.0
    %1909 = vmatprep.subr.mxu0 0.0
    %1910 = vmatpush1.msra.mxu0 0.0
    %1911 = vmatprep.subr.mxu0 0.0
    %1912 = vmatpush1.msra.mxu0 0.0
    %1913 = vmatprep.subr.mxu0 0.0
    %1914 = vmatpush1.msra.mxu0 0.0
    %1915 = vmatprep.subr.mxu0 0.0
    %1916 = vmatpush1.msra.mxu0 0.0
    %1917 = vmatprep.subr.mxu0 0.0
    %1918 = vmatpush1.msra.mxu0 0.0
    %1919 = vmatprep.subr.mxu0 0.0
    %1920 = vmatpush1.msra.mxu0 0.0
    %1921 = vmatprep.subr.mxu0 0.0
    %1922 = vmatpush1.msra.mxu0 0.0
    %1923 = vmatprep.subr.mxu0 0.0
    %1924 = vmatpush1.msra.mxu0 0.0
    %1925 = vmatprep.subr.mxu0 0.0
    %1926 = vmatpush1.msra.mxu0 0.0
    %1927 = vmatprep.subr.mxu0 0.0
    %1928 = vmatpush1.msra.mxu0 0.0
    %1929 = vmatprep.subr.mxu0 0.0
    %1930 = vmatpush1.msra.mxu0 0.0
    %1931 = vmatprep.subr.mxu0 0.0
    %1932 = vmatpush1.msra.mxu0 0.0
    %1933 = vmatprep.subr.mxu0 0.0
    %1934 = vmatpush1.msra.mxu0 0.0
    %1935 = vmatprep.subr.mxu0 0.0
    %1936 = vmatpush1.msra.mxu0 0.0
    %1937 = vmatprep.subr.mxu0 0.0
    %1938 = vmatpush1.msra.mxu0 0.0
    %1939 = vmatprep.subr.mxu0 0.0
    %1940 = vmatpush1.msra.mxu0 0.0
    %1941 = vmatprep.subr.mxu0 0.0
    %1942 = vmatpush1.msra.mxu0 0.0
    %1943 = vmatprep.subr.mxu0 0.0
    %1944 = vmatpush1.msra.mxu0 0.0
    %1945 = vmatprep.subr.mxu0 0.0
    %1946 = vmatpush1.msra.mxu0 0.0
    %1947 = vmatprep.subr.mxu0 0.0
    %1948 = vmatpush1.msra.mxu0 0.0
    %1949 = vmatprep.subr.mxu0 0.0
    %1950 = vmatpush1.msra.mxu0 0.0
    %1951 = vmatprep.subr.mxu0 0.0
    %1952 = vmatpush1.msra.mxu0 0.0
    %1953 = vmatprep.subr.mxu0 0.0
    %1954 = vmatpush1.msra.mxu0 0.0
    %1955 = vmatprep.subr.mxu0 0.0
    %1956 = vmatpush1.msra.mxu0 0.0
    %1957 = vmatprep.subr.mxu0 0.0
    %1958 = vmatpush1.msra.mxu0 0.0
    %1959 = vmatprep.subr.mxu0 0.0
    %1960 = vmatpush1.msra.mxu0 0.0
    %1961 = vmatprep.subr.mxu0 0.0
    %1962 = vmatpush1.msra.mxu0 0.0
    %1963 = vmatprep.mubr.f32.mxu0 0.0
    %1964 = vmatmul.mubr.f32.gmra.mrb[0].mxu0 %v1893
    %v1965 = vpop.f32.mrb[0].mxu0
    %v1966 = vadd.f32 %v1889, %v1965
    %v1967 = vpop.f32.mrb[0].mxu0
    %1968 = vdwg.mxu0
    %v1970 = vsel %vm1895, %v1883, 0
    %1972 = vmatprep.subr.mxu0 0.0
    %1973 = vmatpush1.msra.mxu0 %v1881
    %1974 = vmatprep.subr.mxu0 0.0
    %1975 = vmatpush1.msra.mxu0 %v1882
    %1976 = vmatprep.subr.mxu0 0.0
    %1977 = vmatpush1.msra.mxu0 %v1970
    %1978 = vmatprep.subr.mxu0 0.0
    %1979 = vmatpush1.msra.mxu0 0.0
    %1980 = vmatprep.subr.mxu0 0.0
    %1981 = vmatpush1.msra.mxu0 0.0
    %1982 = vmatprep.subr.mxu0 0.0
    %1983 = vmatpush1.msra.mxu0 0.0
    %1984 = vmatprep.subr.mxu0 0.0
    %1985 = vmatpush1.msra.mxu0 0.0
    %1986 = vmatprep.subr.mxu0 0.0
    %1987 = vmatpush1.msra.mxu0 0.0
    %1988 = vmatprep.subr.mxu0 0.0
    %1989 = vmatpush1.msra.mxu0 0.0
    %1990 = vmatprep.subr.mxu0 0.0
    %1991 = vmatpush1.msra.mxu0 0.0
    %1992 = vmatprep.subr.mxu0 0.0
    %1993 = vmatpush1.msra.mxu0 0.0
    %1994 = vmatprep.subr.mxu0 0.0
    %1995 = vmatpush1.msra.mxu0 0.0
    %1996 = vmatprep.subr.mxu0 0.0
    %1997 = vmatpush1.msra.mxu0 0.0
    %1998 = vmatprep.subr.mxu0 0.0
    %1999 = vmatpush1.msra.mxu0 0.0
    %2000 = vmatprep.subr.mxu0 0.0
    %2001 = vmatpush1.msra.mxu0 0.0
    %2002 = vmatprep.subr.mxu0 0.0
    %2003 = vmatpush1.msra.mxu0 0.0
    %2004 = vmatprep.subr.mxu0 0.0
    %2005 = vmatpush1.msra.mxu0 0.0
    %2006 = vmatprep.subr.mxu0 0.0
    %2007 = vmatpush1.msra.mxu0 0.0
    %2008 = vmatprep.subr.mxu0 0.0
    %2009 = vmatpush1.msra.mxu0 0.0
    %2010 = vmatprep.subr.mxu0 0.0
    %2011 = vmatpush1.msra.mxu0 0.0
    %2012 = vmatprep.subr.mxu0 0.0
    %2013 = vmatpush1.msra.mxu0 0.0
    %2014 = vmatprep.subr.mxu0 0.0
    %2015 = vmatpush1.msra.mxu0 0.0
    %2016 = vmatprep.subr.mxu0 0.0
    %2017 = vmatpush1.msra.mxu0 0.0
    %2018 = vmatprep.subr.mxu0 0.0
    %2019 = vmatpush1.msra.mxu0 0.0
    %2020 = vmatprep.subr.mxu0 0.0
    %2021 = vmatpush1.msra.mxu0 0.0
    %2022 = vmatprep.subr.mxu0 0.0
    %2023 = vmatpush1.msra.mxu0 0.0
    %2024 = vmatprep.subr.mxu0 0.0
    %2025 = vmatpush1.msra.mxu0 0.0
    %2026 = vmatprep.subr.mxu0 0.0
    %2027 = vmatpush1.msra.mxu0 0.0
    %2028 = vmatprep.subr.mxu0 0.0
    %2029 = vmatpush1.msra.mxu0 0.0
    %2030 = vmatprep.subr.mxu0 0.0
    %2031 = vmatpush1.msra.mxu0 0.0
    %2032 = vmatprep.subr.mxu0 0.0
    %2033 = vmatpush1.msra.mxu0 0.0
    %2034 = vmatprep.subr.mxu0 0.0
    %2035 = vmatpush1.msra.mxu0 0.0
    %2036 = vmatprep.mubr.f32.mxu0 0.0
    %2037 = vmatmul.mubr.f32.gmra.mrb[0].mxu0 %v1893
    %v2038 = vpop.f32.mrb[0].mxu0
    %v2039 = vadd.f32 %v1889, %v2038
    %v2040 = vpop.f32.mrb[0].mxu0
    %2041 = vdwg.mxu0
    %v2042 = vxor.u32 %v1966, 2147483648
    %v2043 = vxor.u32 %v2039, 2147483648
    %v2044 = vmul.f32 %v2042, 1.442695
    %v2045 = vpow.pop %v2044
    %v2046 = vmul.f32 %v2043, 1.442695
    %v2047 = vpow.pop %v2046
    %v2048 = vadd.f32 %v2045, 1.0
    %v2049 = vadd.f32 %v2047, 1.0
    %v2050 = vrcp.pop %v2048
    %v2051 = vmul.f32 1.0, %v2050
    %v2052 = vrcp.pop %v2049
    %v2053 = vmul.f32 1.0, %v2052
    %v2054 = vmul.f32 %v1966, %v2051
    %v2055 = vmul.f32 %v2039, %v2053
    %v2056 = vld [vmem:[%s3] sm:$0xff]
    %v2057 = vld [vmem:[%s3 + $0x8] sm:$0xff]
    %v2058 = vld [vmem:[%s3 + $0x10] sm:$0xff]
    %v2059 = vadd.f32 %v495, %v2056
    %v2060 = vadd.f32 %v500, %v2057
    %v2061 = vadd.f32 %v505, %v2058
    %v2062 = vadd.f32 %v575, %v2056
    %v2063 = vadd.f32 %v580, %v2057
    %v2064 = vadd.f32 %v585, %v2058
    %v2065 = vadd.f32 %v815, %v2056
    %v2066 = vadd.f32 %v820, %v2057
    %v2067 = vadd.f32 %v825, %v2058
    %v2068 = vadd.f32 %v895, %v2056
    %v2069 = vadd.f32 %v900, %v2057
    %v2070 = vadd.f32 %v905, %v2058
    %2075 = vrot.lane.b32.xlu0 %v2059, 120
    %v2076 = vpop.permute.xlu0 %2075
    %2077 = vrot.lane.b32.xlu0 %v2062, 120
    %v2078 = vpop.permute.xlu0 %2077
    %2079 = vrot.lane.b32.xlu0 %v2065, 120
    %v2080 = vpop.permute.xlu0 %2079
    %2081 = vrot.lane.b32.xlu0 %v2068, 120
    %v2082 = vpop.permute.xlu0 %2081
    %v2087 = vmax.f32 %v2059, %v2076
    %v2088 = vmax.f32 %v2062, %v2078
    %v2089 = vmax.f32 %v2065, %v2080
    %v2090 = vmax.f32 %v2068, %v2082
    %2091 = vrot.lane.b32.xlu0 %v2059, 112
    %v2092 = vpop.permute.xlu0 %2091
    %2093 = vrot.lane.b32.xlu0 %v2062, 112
    %v2094 = vpop.permute.xlu0 %2093
    %2095 = vrot.lane.b32.xlu0 %v2065, 112
    %v2096 = vpop.permute.xlu0 %2095
    %2097 = vrot.lane.b32.xlu0 %v2068, 112
    %v2098 = vpop.permute.xlu0 %2097
    %v2103 = vmax.f32 %v2087, %v2092
    %v2104 = vmax.f32 %v2088, %v2094
    %v2105 = vmax.f32 %v2089, %v2096
    %v2106 = vmax.f32 %v2090, %v2098
    %v2107 = vmax.f32 %v2103, %v2060
    %v2108 = vmax.f32 %v2104, %v2063
    %v2109 = vmax.f32 %v2105, %v2066
    %v2110 = vmax.f32 %v2106, %v2069
    %2115 = vrot.lane.b32.xlu0 %v2060, 120
    %v2116 = vpop.permute.xlu0 %2115
    %2117 = vrot.lane.b32.xlu0 %v2063, 120
    %v2118 = vpop.permute.xlu0 %2117
    %2119 = vrot.lane.b32.xlu0 %v2066, 120
    %v2120 = vpop.permute.xlu0 %2119
    %2121 = vrot.lane.b32.xlu0 %v2069, 120
    %v2122 = vpop.permute.xlu0 %2121
    %v2127 = vmax.f32 %v2107, %v2116
    %v2128 = vmax.f32 %v2108, %v2118
    %v2129 = vmax.f32 %v2109, %v2120
    %v2130 = vmax.f32 %v2110, %v2122
    %2131 = vrot.lane.b32.xlu0 %v2060, 112
    %v2132 = vpop.permute.xlu0 %2131
    %2133 = vrot.lane.b32.xlu0 %v2063, 112
    %v2134 = vpop.permute.xlu0 %2133
    %2135 = vrot.lane.b32.xlu0 %v2066, 112
    %v2136 = vpop.permute.xlu0 %2135
    %2137 = vrot.lane.b32.xlu0 %v2069, 112
    %v2138 = vpop.permute.xlu0 %2137
    %v2143 = vmax.f32 %v2127, %v2132
    %v2144 = vmax.f32 %v2128, %v2134
    %v2145 = vmax.f32 %v2129, %v2136
    %v2146 = vmax.f32 %v2130, %v2138
    %v2147 = vmax.f32 %v2143, %v2061
    %v2148 = vmax.f32 %v2144, %v2064
    %v2149 = vmax.f32 %v2145, %v2067
    %v2150 = vmax.f32 %v2146, %v2070
    %2155 = vrot.lane.b32.xlu0 %v2061, 120
    %v2156 = vpop.permute.xlu0 %2155
    %2157 = vrot.lane.b32.xlu0 %v2064, 120
    %v2158 = vpop.permute.xlu0 %2157
    %2159 = vrot.lane.b32.xlu0 %v2067, 120
    %v2160 = vpop.permute.xlu0 %2159
    %2161 = vrot.lane.b32.xlu0 %v2070, 120
    %v2162 = vpop.permute.xlu0 %2161
    %v2167 = vmax.f32 %v2147, %v2156
    %v2168 = vmax.f32 %v2148, %v2158
    %v2169 = vmax.f32 %v2149, %v2160
    %v2170 = vmax.f32 %v2150, %v2162
    %2171 = vrot.lane.b32.xlu0 %v2061, 112
    %v2172 = vpop.permute.xlu0 %2171
    %2173 = vrot.lane.b32.xlu0 %v2064, 112
    %v2174 = vpop.permute.xlu0 %2173
    %2175 = vrot.lane.b32.xlu0 %v2067, 112
    %v2176 = vpop.permute.xlu0 %2175
    %2177 = vrot.lane.b32.xlu0 %v2070, 112
    %v2178 = vpop.permute.xlu0 %2177
    %v2183 = vmax.f32 %v2167, %v2172
    %v2184 = vmax.f32 %v2168, %v2174
    %v2185 = vmax.f32 %v2169, %v2176
    %v2186 = vmax.f32 %v2170, %v2178
    %v2187 = vcombine.high %v2183, 0.0
    %v2189 = vunpack.c.l.s4 1983009808
    %v2190 = vunpack.c.0.s8 %v2189
    %v2191 = vlaneseq
    %v2192 = vshrl.u32 %v2191, 7
    %v2193 = vsub.s32 %v2190, %v2192
    %v2194 = vrot.slane %v2183, %v2193
    %v2196 = vunpack.c.l.s4 1983009808
    %v2197 = vunpack.c.0.s8 %v2196
    %v2198 = vlaneseq
    %v2199 = vshrl.u32 %v2198, 7
    %v2200 = vsub.s32 %v2197, %v2199
    %v2201 = vrot.slane %v2187, %v2200
    %v2202 = vcombine.high %v2184, 0.0
    %v2204 = vunpack.c.l.s4 1983009808
    %v2205 = vunpack.c.0.s8 %v2204
    %v2206 = vlaneseq
    %v2207 = vshrl.u32 %v2206, 7
    %v2208 = vsub.s32 %v2205, %v2207
    %v2209 = vrot.slane %v2184, %v2208
    %v2211 = vunpack.c.l.s4 1983009808
    %v2212 = vunpack.c.0.s8 %v2211
    %v2213 = vlaneseq
    %v2214 = vshrl.u32 %v2213, 7
    %v2215 = vsub.s32 %v2212, %v2214
    %v2216 = vrot.slane %v2202, %v2215
    %v2217 = vcombine.low %v2194, %v2209
    %v2218 = vcombine.high %v2194, %v2209
    %v2220 = vunpack.c.l.s4 1934713408
    %v2221 = vunpack.c.0.s8 %v2220
    %v2222 = vlaneseq
    %v2223 = vshrl.u32 %v2222, 7
    %v2224 = vsub.s32 %v2221, %v2223
    %v2225 = vrot.slane %v2217, %v2224
    %v2227 = vunpack.c.l.s4 1934713408
    %v2228 = vunpack.c.0.s8 %v2227
    %v2229 = vlaneseq
    %v2230 = vshrl.u32 %v2229, 7
    %v2231 = vsub.s32 %v2228, %v2230
    %v2232 = vrot.slane %v2218, %v2231
    %v2233 = vcombine.low %v2201, %v2216
    %v2234 = vcombine.high %v2201, %v2216
    %v2236 = vunpack.c.l.s4 1934713408
    %v2237 = vunpack.c.0.s8 %v2236
    %v2238 = vlaneseq
    %v2239 = vshrl.u32 %v2238, 7
    %v2240 = vsub.s32 %v2237, %v2239
    %v2241 = vrot.slane %v2233, %v2240
    %v2243 = vunpack.c.l.s4 1934713408
    %v2244 = vunpack.c.0.s8 %v2243
    %v2245 = vlaneseq
    %v2246 = vshrl.u32 %v2245, 7
    %v2247 = vsub.s32 %v2244, %v2246
    %v2248 = vrot.slane %v2234, %v2247
    %v2249 = vcombine.high %v2225, 0.0
    %v2250 = vcombine.high %v2232, 0.0
    %v2251 = vcombine.high %v2241, 0.0
    %v2252 = vcombine.high %v2248, 0.0
    %v2253 = vcombine.high %v2185, 0.0
    %v2255 = vunpack.c.l.s4 1983009808
    %v2256 = vunpack.c.0.s8 %v2255
    %v2257 = vlaneseq
    %v2258 = vshrl.u32 %v2257, 7
    %v2259 = vsub.s32 %v2256, %v2258
    %v2260 = vrot.slane %v2185, %v2259
    %v2262 = vunpack.c.l.s4 1983009808
    %v2263 = vunpack.c.0.s8 %v2262
    %v2264 = vlaneseq
    %v2265 = vshrl.u32 %v2264, 7
    %v2266 = vsub.s32 %v2263, %v2265
    %v2267 = vrot.slane %v2253, %v2266
    %v2268 = vcombine.high %v2186, 0.0
    %v2270 = vunpack.c.l.s4 1983009808
    %v2271 = vunpack.c.0.s8 %v2270
    %v2272 = vlaneseq
    %v2273 = vshrl.u32 %v2272, 7
    %v2274 = vsub.s32 %v2271, %v2273
    %v2275 = vrot.slane %v2186, %v2274
    %v2277 = vunpack.c.l.s4 1983009808
    %v2278 = vunpack.c.0.s8 %v2277
    %v2279 = vlaneseq
    %v2280 = vshrl.u32 %v2279, 7
    %v2281 = vsub.s32 %v2278, %v2280
    %v2282 = vrot.slane %v2268, %v2281
    %v2283 = vcombine.low %v2260, %v2275
    %v2284 = vcombine.high %v2260, %v2275
    %v2286 = vunpack.c.l.s4 1934713408
    %v2287 = vunpack.c.0.s8 %v2286
    %v2288 = vlaneseq
    %v2289 = vshrl.u32 %v2288, 7
    %v2290 = vsub.s32 %v2287, %v2289
    %v2291 = vrot.slane %v2283, %v2290
    %v2293 = vunpack.c.l.s4 1934713408
    %v2294 = vunpack.c.0.s8 %v2293
    %v2295 = vlaneseq
    %v2296 = vshrl.u32 %v2295, 7
    %v2297 = vsub.s32 %v2294, %v2296
    %v2298 = vrot.slane %v2284, %v2297
    %v2299 = vcombine.low %v2267, %v2282
    %v2300 = vcombine.high %v2267, %v2282
    %v2302 = vunpack.c.l.s4 1934713408
    %v2303 = vunpack.c.0.s8 %v2302
    %v2304 = vlaneseq
    %v2305 = vshrl.u32 %v2304, 7
    %v2306 = vsub.s32 %v2303, %v2305
    %v2307 = vrot.slane %v2299, %v2306
    %v2309 = vunpack.c.l.s4 1934713408
    %v2310 = vunpack.c.0.s8 %v2309
    %v2311 = vlaneseq
    %v2312 = vshrl.u32 %v2311, 7
    %v2313 = vsub.s32 %v2310, %v2312
    %v2314 = vrot.slane %v2300, %v2313
    %v2315 = vcombine.high %v2291, 0.0
    %v2316 = vcombine.high %v2298, 0.0
    %v2317 = vcombine.high %v2307, 0.0
    %v2318 = vcombine.high %v2314, 0.0
    %2321 = vrot.lane.b32.xlu0 %v2249, 8
    %v2322 = vpop.permute.xlu0 %2321
    %2323 = vrot.lane.b32.xlu0 %v2315, 8
    %v2324 = vpop.permute.xlu0 %2323
    %2329 = vrot.lane.b32.xlu0 %v2232, 16
    %v2330 = vpop.permute.xlu0 %2329
    %2331 = vrot.lane.b32.xlu0 %v2298, 16
    %v2332 = vpop.permute.xlu0 %2331
    %2337 = vrot.lane.b32.xlu0 %v2250, 24
    %v2338 = vpop.permute.xlu0 %2337
    %2339 = vrot.lane.b32.xlu0 %v2316, 24
    %v2340 = vpop.permute.xlu0 %2339
    %2345 = vrot.lane.b32.xlu0 %v2241, 32
    %v2346 = vpop.permute.xlu0 %2345
    %2347 = vrot.lane.b32.xlu0 %v2307, 32
    %v2348 = vpop.permute.xlu0 %2347
    %2353 = vrot.lane.b32.xlu0 %v2251, 40
    %v2354 = vpop.permute.xlu0 %2353
    %2355 = vrot.lane.b32.xlu0 %v2317, 40
    %v2356 = vpop.permute.xlu0 %2355
    %2361 = vrot.lane.b32.xlu0 %v2248, 48
    %v2362 = vpop.permute.xlu0 %2361
    %2363 = vrot.lane.b32.xlu0 %v2314, 48
    %v2364 = vpop.permute.xlu0 %2363
    %2369 = vrot.lane.b32.xlu0 %v2252, 56
    %v2370 = vpop.permute.xlu0 %2369
    %2371 = vrot.lane.b32.xlu0 %v2318, 56
    %v2372 = vpop.permute.xlu0 %2371
    %v2375 = vsel %vm1836, %v2225, %v2322
    %v2376 = vsel %vm1836, %v2291, %v2324
    %v2377 = vsel %vm62, %v2375, %v2330
    %v2378 = vsel %vm62, %v2376, %v2332
    %v2379 = vsel %vm1849, %v2377, %v2338
    %v2380 = vsel %vm1849, %v2378, %v2340
    %v2381 = vsel %vm1856, %v2379, %v2346
    %v2382 = vsel %vm1856, %v2380, %v2348
    %v2383 = vsel %vm1863, %v2381, %v2354
    %v2384 = vsel %vm1863, %v2382, %v2356
    %v2385 = vsel %vm1870, %v2383, %v2362
    %v2386 = vsel %vm1870, %v2384, %v2364
    %v2387 = vsel %vm1877, %v2385, %v2370
    %v2388 = vsel %vm1877, %v2386, %v2372
    %v2389 = vld [vmem:[%s6] sm:$0x3]
    %v2390 = vld [vmem:[%s7] sm:$0x3]
    %2392 = vset.pattern.permute.xlu0 0
    %2393 = vperm.xlu0 %2392, %v2390
    %v2394 = vpop.permute.xlu0 %2393
    %vm2396 = vcmask 15360
    %v2398 = vsel %vm2396, %v2389, 0
    %v2401 = vsel %vm1895, %v2387, 0
    %2403 = vmatprep.subr.mxu0 0.0
    %2404 = vmatpush1.msra.mxu0 %v2401
    %2405 = vmatprep.subr.mxu0 0.0
    %2406 = vmatpush1.msra.mxu0 0.0
    %2407 = vmatprep.subr.mxu0 0.0
    %2408 = vmatpush1.msra.mxu0 0.0
    %2409 = vmatprep.subr.mxu0 0.0
    %2410 = vmatpush1.msra.mxu0 0.0
    %2411 = vmatprep.subr.mxu0 0.0
    %2412 = vmatpush1.msra.mxu0 0.0
    %2413 = vmatprep.subr.mxu0 0.0
    %2414 = vmatpush1.msra.mxu0 0.0
    %2415 = vmatprep.subr.mxu0 0.0
    %2416 = vmatpush1.msra.mxu0 0.0
    %2417 = vmatprep.subr.mxu0 0.0
    %2418 = vmatpush1.msra.mxu0 0.0
    %2419 = vmatprep.subr.mxu0 0.0
    %2420 = vmatpush1.msra.mxu0 0.0
    %2421 = vmatprep.subr.mxu0 0.0
    %2422 = vmatpush1.msra.mxu0 0.0
    %2423 = vmatprep.subr.mxu0 0.0
    %2424 = vmatpush1.msra.mxu0 0.0
    %2425 = vmatprep.subr.mxu0 0.0
    %2426 = vmatpush1.msra.mxu0 0.0
    %2427 = vmatprep.subr.mxu0 0.0
    %2428 = vmatpush1.msra.mxu0 0.0
    %2429 = vmatprep.subr.mxu0 0.0
    %2430 = vmatpush1.msra.mxu0 0.0
    %2431 = vmatprep.subr.mxu0 0.0
    %2432 = vmatpush1.msra.mxu0 0.0
    %2433 = vmatprep.subr.mxu0 0.0
    %2434 = vmatpush1.msra.mxu0 0.0
    %2435 = vmatprep.subr.mxu0 0.0
    %2436 = vmatpush1.msra.mxu0 0.0
    %2437 = vmatprep.subr.mxu0 0.0
    %2438 = vmatpush1.msra.mxu0 0.0
    %2439 = vmatprep.subr.mxu0 0.0
    %2440 = vmatpush1.msra.mxu0 0.0
    %2441 = vmatprep.subr.mxu0 0.0
    %2442 = vmatpush1.msra.mxu0 0.0
    %2443 = vmatprep.subr.mxu0 0.0
    %2444 = vmatpush1.msra.mxu0 0.0
    %2445 = vmatprep.subr.mxu0 0.0
    %2446 = vmatpush1.msra.mxu0 0.0
    %2447 = vmatprep.subr.mxu0 0.0
    %2448 = vmatpush1.msra.mxu0 0.0
    %2449 = vmatprep.subr.mxu0 0.0
    %2450 = vmatpush1.msra.mxu0 0.0
    %2451 = vmatprep.subr.mxu0 0.0
    %2452 = vmatpush1.msra.mxu0 0.0
    %2453 = vmatprep.subr.mxu0 0.0
    %2454 = vmatpush1.msra.mxu0 0.0
    %2455 = vmatprep.subr.mxu0 0.0
    %2456 = vmatpush1.msra.mxu0 0.0
    %2457 = vmatprep.subr.mxu0 0.0
    %2458 = vmatpush1.msra.mxu0 0.0
    %2459 = vmatprep.subr.mxu0 0.0
    %2460 = vmatpush1.msra.mxu0 0.0
    %2461 = vmatprep.subr.mxu0 0.0
    %2462 = vmatpush1.msra.mxu0 0.0
    %2463 = vmatprep.subr.mxu0 0.0
    %2464 = vmatpush1.msra.mxu0 0.0
    %2465 = vmatprep.subr.mxu0 0.0
    %2466 = vmatpush1.msra.mxu0 0.0
    %2467 = vmatprep.mubr.f32.mxu0 0.0
    %2468 = vmatmul.mubr.f32.gmra.mrb[0].mxu0 %v2398
    %v2469 = vpop.f32.mrb[0].mxu0
    %v2470 = vadd.f32 %v2394, %v2469
    %v2471 = vpop.f32.mrb[0].mxu0
    %2472 = vdwg.mxu0
    %v2474 = vsel %vm1895, %v2388, 0
    %2476 = vmatprep.subr.mxu0 0.0
    %2477 = vmatpush1.msra.mxu0 %v2474
    %2478 = vmatprep.subr.mxu0 0.0
    %2479 = vmatpush1.msra.mxu0 0.0
    %2480 = vmatprep.subr.mxu0 0.0
    %2481 = vmatpush1.msra.mxu0 0.0
    %2482 = vmatprep.subr.mxu0 0.0
    %2483 = vmatpush1.msra.mxu0 0.0
    %2484 = vmatprep.subr.mxu0 0.0
    %2485 = vmatpush1.msra.mxu0 0.0
    %2486 = vmatprep.subr.mxu0 0.0
    %2487 = vmatpush1.msra.mxu0 0.0
    %2488 = vmatprep.subr.mxu0 0.0
    %2489 = vmatpush1.msra.mxu0 0.0
    %2490 = vmatprep.subr.mxu0 0.0
    %2491 = vmatpush1.msra.mxu0 0.0
    %2492 = vmatprep.subr.mxu0 0.0
    %2493 = vmatpush1.msra.mxu0 0.0
    %2494 = vmatprep.subr.mxu0 0.0
    %2495 = vmatpush1.msra.mxu0 0.0
    %2496 = vmatprep.subr.mxu0 0.0
    %2497 = vmatpush1.msra.mxu0 0.0
    %2498 = vmatprep.subr.mxu0 0.0
    %2499 = vmatpush1.msra.mxu0 0.0
    %2500 = vmatprep.subr.mxu0 0.0
    %2501 = vmatpush1.msra.mxu0 0.0
    %2502 = vmatprep.subr.mxu0 0.0
    %2503 = vmatpush1.msra.mxu0 0.0
    %2504 = vmatprep.subr.mxu0 0.0
    %2505 = vmatpush1.msra.mxu0 0.0
    %2506 = vmatprep.subr.mxu0 0.0
    %2507 = vmatpush1.msra.mxu0 0.0
    %2508 = vmatprep.subr.mxu0 0.0
    %2509 = vmatpush1.msra.mxu0 0.0
    %2510 = vmatprep.subr.mxu0 0.0
    %2511 = vmatpush1.msra.mxu0 0.0
    %2512 = vmatprep.subr.mxu0 0.0
    %2513 = vmatpush1.msra.mxu0 0.0
    %2514 = vmatprep.subr.mxu0 0.0
    %2515 = vmatpush1.msra.mxu0 0.0
    %2516 = vmatprep.subr.mxu0 0.0
    %2517 = vmatpush1.msra.mxu0 0.0
    %2518 = vmatprep.subr.mxu0 0.0
    %2519 = vmatpush1.msra.mxu0 0.0
    %2520 = vmatprep.subr.mxu0 0.0
    %2521 = vmatpush1.msra.mxu0 0.0
    %2522 = vmatprep.subr.mxu0 0.0
    %2523 = vmatpush1.msra.mxu0 0.0
    %2524 = vmatprep.subr.mxu0 0.0
    %2525 = vmatpush1.msra.mxu0 0.0
    %2526 = vmatprep.subr.mxu0 0.0
    %2527 = vmatpush1.msra.mxu0 0.0
    %2528 = vmatprep.subr.mxu0 0.0
    %2529 = vmatpush1.msra.mxu0 0.0
    %2530 = vmatprep.subr.mxu0 0.0
    %2531 = vmatpush1.msra.mxu0 0.0
    %2532 = vmatprep.subr.mxu0 0.0
    %2533 = vmatpush1.msra.mxu0 0.0
    %2534 = vmatprep.subr.mxu0 0.0
    %2535 = vmatpush1.msra.mxu0 0.0
    %2536 = vmatprep.subr.mxu0 0.0
    %2537 = vmatpush1.msra.mxu0 0.0
    %2538 = vmatprep.subr.mxu0 0.0
    %2539 = vmatpush1.msra.mxu0 0.0
    %2540 = vmatprep.mubr.f32.mxu0 0.0
    %2541 = vmatmul.mubr.f32.gmra.mrb[0].mxu0 %v2398
    %v2542 = vpop.f32.mrb[0].mxu0
    %v2543 = vadd.f32 %v2394, %v2542
    %v2544 = vpop.f32.mrb[0].mxu0
    %2545 = vdwg.mxu0
    %v2546 = vxor.u32 %v2470, 2147483648
    %v2547 = vxor.u32 %v2543, 2147483648
    %v2548 = vmul.f32 %v2546, 1.442695
    %v2549 = vpow.pop %v2548
    %v2550 = vmul.f32 %v2547, 1.442695
    %v2551 = vpow.pop %v2550
    %v2552 = vadd.f32 %v2549, 1.0
    %v2553 = vadd.f32 %v2551, 1.0
    %v2554 = vrcp.pop %v2552
    %v2555 = vmul.f32 1.0, %v2554
    %v2556 = vrcp.pop %v2553
    %v2557 = vmul.f32 1.0, %v2556
    %v2558 = vmul.f32 %v2470, %v2555
    %v2559 = vmul.f32 %v2543, %v2557
    %vm2560 = vcmask 517120
    %2561 = vst.msk [vmem:[#allocation5] sm:$0x3] %vm2560, %v2054
    %2562 = vst.msk [vmem:[#allocation5 + $0x4] sm:$0x3] %vm2560, %v2055
    %2563 = vst.msk [vmem:[#allocation5 + $0x2] sm:$0x3] %vm2560, %v2558
    %2564 = vst.msk [vmem:[#allocation5 + $0x6] sm:$0x3] %vm2560, %v2559
    // Predicated region
    $region38: #{tpu_custom_call.1} parent=1 // pred_check
      _
    $region39: #{tpu_custom_call.1} parent=1 // pred_check_branch
      %2566 = sbr.rel (0) target = $region41
    $region40: #{tpu_custom_call.1} parent=1 // pred_region
      %s2568 = ssub.s32 128, 128
      %2569 = vsyncadd [#allocation4], %s2568
      %s2570 = sshll.u32 [#allocation5], 4
      %s2571 = int_to_ptr.vmem [resolvable:$true] %s2570
      %2576 = dma.vmem_to_hbm [thread:$0]  %s2571, 128, %s8, [#allocation4], 64, 64, 4
    $region41: #{tpu_custom_call.1} parent=1 // pred_fallthru
      _
    // Predicated region
    $region42: #{tpu_custom_call.1} parent=1 // pred_check
      _
    $region43: #{tpu_custom_call.1} parent=1 // pred_check_branch
      %2578 = sbr.rel (0) target = $region45
    $region44: #{tpu_custom_call.1} parent=1 // pred_region
      %2579 = dma.done [#allocation4], 128
    $region45: #{tpu_custom_call.1} parent=1 // pred_fallthru
      _
    %2580 = vsyncpa [#allocation3], 1
    %2581 = vsyncpa [#allocation4], 1

</llo_original>
